<compile_context>
chip_gen: v7x
topology: tpu7x:2x2x1
jax: 0.10.0
libtpu: 0.0.40
codegen_flags: <defaults>
</compile_context>

<pallas_src>
import functools

import jax
import jax.numpy as jnp
import numpy as np
from jax.experimental import pallas as pl
from jax.experimental.pallas import tpu as pltpu


def _round_up(n, m):
    return ((n + m - 1) // m) * m


# ----------------------------- fused forward kernel -----------------------------
def _make_fused_kernel(T, Bp, H, Gp, num_layers, Tc, unroll):
    H2, H3, H4 = 2 * H, 3 * H, 4 * H

    def kernel(*refs):
        # inputs : g0 (T,Bp,Gp) f32, whh0 (H,Gp) f32,
        #          [wih_l bf16, whh_l f32, b_l f32] for l = 1..L-1, fc bf16
        # output : (Bp, Pp) f32
        # scratch: gates (Tc,Bp,Gp) f32, hseq (T,Bp,H) f32   (only if L > 1)
        g0_ref = refs[0]
        whh0_ref = refs[1]
        n_in = 3 + 3 * (num_layers - 1)
        fc_ref = refs[n_in - 1]
        out_ref = refs[n_in]
        gates_scr = refs[n_in + 1] if num_layers > 1 else None
        hseq_scr = refs[n_in + 2] if num_layers > 1 else None

        def gate_math(g, c):
            # gates packed (i, f, o, g): one sigmoid over 3H lanes, one tanh.
            sig = jax.nn.sigmoid(g[:, :H3])
            c_new = sig[:, H:H2] * c + sig[:, :H] * jnp.tanh(g[:, H3:H4])
            h_new = sig[:, H2:H3] * jnp.tanh(c_new)
            return h_new, c_new

        zero = jnp.zeros((Bp, H), jnp.float32)

        # ---- layer 0: gate preactivations were precomputed in the wrapper ----
        whh0 = whh0_ref[...]                     # loop-invariant (stays in vregs)
        write_seq0 = num_layers > 1

        def step0(t, carry):
            h, c = carry
            g = g0_ref[t] + jnp.dot(h, whh0, preferred_element_type=jnp.float32)
            h_new, c_new = gate_math(g, c)
            if write_seq0:
                hseq_scr[t] = h_new              # feeds next layer; never leaves VMEM
            return h_new, c_new

        h_last, _ = jax.lax.fori_loop(0, T, step0, (zero, zero), unroll=unroll)

        # ---- layers 1..L-1: chunked hoisted input matmul + recurrence ----
        for l in range(1, num_layers):
            wih = refs[2 + 3 * (l - 1)][...]     # (H, Gp) bf16
            whh = refs[3 + 3 * (l - 1)][...]     # (H, Gp) f32, loop-invariant
            b = refs[4 + 3 * (l - 1)][...]       # (1, Gp) f32
            last = l == num_layers - 1

            h = c = zero
            for t0 in range(0, T, Tc):
                tc = min(Tc, T - t0)
                # Hoisted input projection for this chunk: bf16 x bf16 -> f32.
                chunk = hseq_scr[t0:t0 + tc].reshape(tc * Bp, H).astype(jnp.bfloat16)
                pre = jnp.dot(chunk, wih, preferred_element_type=jnp.float32) + b
                gates_scr[0:tc] = pre.reshape(tc, Bp, Gp)

                def step(t, carry, whh=whh, t0=t0, last=last):
                    hh, cc = carry
                    g = gates_scr[t] + jnp.dot(hh, whh,
                                               preferred_element_type=jnp.float32)
                    h_new, c_new = gate_math(g, cc)
                    if not last:
                        # In-place reuse is safe: this chunk of hseq was already
                        # consumed by the matmul above.
                        hseq_scr[t0 + t] = h_new
                    return h_new, c_new

                h, c = jax.lax.fori_loop(0, tc, step, (h, c),
                                         unroll=max(1, min(unroll, tc)))
            h_last = h

        # ---- projection (no bias, bf16 weights) + exact L2 normalize ----
        y = jnp.dot(h_last.astype(jnp.bfloat16), fc_ref[...],
                    preferred_element_type=jnp.float32)
        ssq = jnp.sum(y * y, axis=-1, keepdims=True)        # padded cols are 0
        out_ref[...] = (y / jnp.maximum(jnp.sqrt(ssq), 1e-12)).astype(out_ref.dtype)

    return kernel


# --------------------------------- wrapper ---------------------------------
def eeg_featnet_forward(kparams, x_btc, *, t_chunk=256, unroll=8):
    """x_btc: (B, T, C) batch_first, like the PyTorch module. Returns (B, P)."""
    B, T, C = x_btc.shape
    H, P, Gp, Pp = kparams["H"], kparams["P"], kparams["Gp"], kparams["Pp"]
    layers = kparams["layers"]
    L = len(layers)
    Bp = _round_up(B, 8)                 # full sublane tile; pad rows dropped at end
    Tc = max(1, min(t_chunk, T))         # gate-chunk length inside the kernel
    unroll = max(1, min(unroll, T))

    # Layer-0 input projection hoisted into XLA (lane-sparse C-wide input and a
    # K=C contraction have no business inside the kernel).  Padded batch rows
    # get zero preactivations, so their h/c stay exactly zero in every layer.
    l0 = layers[0]
    x_tb = jnp.transpose(x_btc.astype(jnp.float32), (1, 0, 2))        # (T, B, C)
    g0 = jnp.dot(x_tb.reshape(T * B, C).astype(jnp.bfloat16), l0["wih"],
                 preferred_element_type=jnp.float32) + l0["b"]
    g0 = jnp.zeros((T, Bp, Gp), jnp.float32).at[:, :B, :].set(g0.reshape(T, B, Gp))

    args = [g0, l0["whh"]]
    for ld in layers[1:]:
        args += [ld["wih"], ld["whh"], ld["b"]]
    args.append(kparams["fc"])

    scratch = []
    if L > 1:
        scratch = [pltpu.VMEM((Tc, Bp, Gp), jnp.float32),   # per-chunk gate preacts
                   pltpu.VMEM((T, Bp, H), jnp.float32)]     # inter-layer hidden seq

    # Explicit scoped-VMEM limit: v7x only has 64 MiB physical VMEM, so size Tc
    # (and this limit) to stay well under it on long sequences.
    lane = 128
    need = (T * Bp * Gp + Tc * Bp * Gp + T * Bp * lane) * 4 + (4 << 20)
    vmem_limit = max(32 << 20, int(1.5 * need))

    vm = pl.BlockSpec(memory_space=pltpu.MemorySpace.VMEM)
    out = pl.pallas_call(
        _make_fused_kernel(T=T, Bp=Bp, H=H, Gp=Gp, num_layers=L, Tc=Tc,
                           unroll=unroll),
        out_shape=jax.ShapeDtypeStruct((Bp, Pp), jnp.float32),
        in_specs=[vm] * len(args),
        out_specs=vm,
        scratch_shapes=scratch,
        compiler_params=pltpu.CompilerParams(vmem_limit_bytes=vmem_limit),
    )(*args)
    return out[:B, :P]


# --------------------------------- parameters ---------------------------------
def init_raw_params(key, in_channels, n_features, projection_dim, num_layers):
    """PyTorch-style init U(-1/sqrt(H), 1/sqrt(H)); raw (unpadded) layout."""
    bound = 1.0 / np.sqrt(n_features)
    keys = jax.random.split(key, 4 * num_layers + 1)
    layers = []
    d_in = in_channels
    for l in range(num_layers):
        k0, k1, k2, k3 = keys[4 * l:4 * l + 4]
        w_ih = jax.random.uniform(k0, (4 * n_features, d_in), jnp.float32, -bound, bound)
        w_hh = jax.random.uniform(k1, (4 * n_features, n_features), jnp.float32, -bound, bound)
        b_ih = jax.random.uniform(k2, (4 * n_features,), jnp.float32, -bound, bound)
        b_hh = jax.random.uniform(k3, (4 * n_features,), jnp.float32, -bound, bound)
        layers.append((w_ih, w_hh, b_ih, b_hh))
        d_in = n_features
    fc_w = jax.random.uniform(keys[-1], (projection_dim, n_features), jnp.float32,
                              -bound, bound)
    return {"lstm": layers, "fc": fc_w}


def _reorder_pad_gates(w_t, H, Gp):
    """(K, 4H) PyTorch gate blocks (i,f,g,o) -> (K, Gp) packed as (i,f,o,g)."""
    K = w_t.shape[0]
    out = jnp.zeros((K, Gp), jnp.float32)
    for slot, pt in enumerate((0, 1, 3, 2)):       # kernel order i, f, o, g
        out = out.at[:, slot * H:(slot + 1) * H].set(w_t[:, pt * H:(pt + 1) * H])
    return out


def prep_kernel_params(raw, in_channels, n_features, projection_dim):
    """Transpose, gate-reorder, zero-pad and (where hoisted) bf16-cast weights."""
    H, P = n_features, projection_dim
    Gp = _round_up(4 * H, 128)      # packed gate width (4*32 = 128 here: 1 vreg)
    Pp = _round_up(P, 128)
    layers = []
    for (w_ih, w_hh, b_ih, b_hh) in raw["lstm"]:
        layers.append({
            "wih": _reorder_pad_gates(w_ih.T, H, Gp).astype(jnp.bfloat16),
            "whh": _reorder_pad_gates(w_hh.T, H, Gp),                     # f32
            "b": _reorder_pad_gates((b_ih + b_hh)[None, :], H, Gp),       # f32
        })
    fc = jnp.zeros((H, Pp), jnp.float32).at[:, :P].set(raw["fc"].T)
    return {"layers": layers, "fc": fc.astype(jnp.bfloat16),
            "H": H, "P": P, "Gp": Gp, "Pp": Pp}


# ------------------------------ pure-JAX reference ------------------------------
def reference_forward(raw, x_btc, matmul_dtype=jnp.float32):
    """Faithful reference.  matmul_dtype=bf16 mirrors the kernel's casts on the
    hoisted input/fc matmuls (the recurrent h @ W_hh stays f32, like the kernel)."""
    x = jnp.transpose(x_btc.astype(jnp.float32), (1, 0, 2))   # (T, B, C)
    B = x.shape[1]
    for (w_ih, w_hh, b_ih, b_hh) in raw["lstm"]:
        H = w_hh.shape[1]
        wih_t = w_ih.T.astype(matmul_dtype)
        whh_t = w_hh.T
        b = b_ih + b_hh

        def step(carry, x_t, wih_t=wih_t, whh_t=whh_t, b=b, H=H):
            h, c = carry
            g = (jnp.dot(x_t.astype(matmul_dtype), wih_t,
                         preferred_element_type=jnp.float32)
                 + jnp.dot(h, whh_t, preferred_element_type=jnp.float32) + b)
            i = jax.nn.sigmoid(g[:, :H])
            f = jax.nn.sigmoid(g[:, H:2 * H])
            gg = jnp.tanh(g[:, 2 * H:3 * H])
            o = jax.nn.sigmoid(g[:, 3 * H:])
            c = f * c + i * gg
            h = o * jnp.tanh(c)
            return (h, c), h

        init = (jnp.zeros((B, H), jnp.float32), jnp.zeros((B, H), jnp.float32))
        (_, _), ys = jax.lax.scan(step, init, x)
        x = ys
    y = jnp.dot(x[-1].astype(matmul_dtype), raw["fc"].T.astype(matmul_dtype),
                preferred_element_type=jnp.float32)
    n = jnp.sqrt(jnp.sum(y * y, axis=-1, keepdims=True))
    return y / jnp.maximum(n, 1e-12)


if __name__ == "__main__":
    # Small shapes consistent with the module's forward: (B, T, in_channels).
    B, T, in_channels = 2, 8, 4
    n_features, projection_dim, num_layers = 32, 16, 2

    key = jax.random.PRNGKey(0)
    kx, kp = jax.random.split(key)
    x = jax.random.normal(kx, (B, T, in_channels), dtype=jnp.float32)

    raw = init_raw_params(kp, in_channels, n_features, projection_dim, num_layers)
    kparams = prep_kernel_params(raw, in_channels, n_features, projection_dim)

    fwd = jax.jit(functools.partial(eeg_featnet_forward, kparams))
    out = jax.block_until_ready(fwd(x))
    assert out.shape == (B, projection_dim)

    # (1) precision-matched reference (same bf16 casts on the hoisted matmuls):
    #     tight tolerance proves the kernel math itself is right.
    ref_bf16 = reference_forward(raw, x, matmul_dtype=jnp.bfloat16)
    np.testing.assert_allclose(np.asarray(out), np.asarray(ref_bf16),
                               rtol=2e-3, atol=2e-3)
    # (2) pure-f32 reference: the only difference is deliberate bf16 rounding
    #     on the hoisted (non-recurrent) matmuls.
    ref_f32 = reference_forward(raw, x, matmul_dtype=jnp.float32)
    np.testing.assert_allclose(np.asarray(out), np.asarray(ref_f32),
                               rtol=2e-2, atol=2e-2)
    print("KERNEL_OK")
</pallas_src>

<mosaic_0001>
module attributes {stable_mosaic.version = 11 : i64} {
  func.func @kernel(%arg0: memref<8x8x128xf32, #tpu.memory_space<vmem>>, %arg1: memref<32x128xf32, #tpu.memory_space<vmem>>, %arg2: memref<32x128xbf16, #tpu.memory_space<vmem>>, %arg3: memref<32x128xf32, #tpu.memory_space<vmem>>, %arg4: memref<1x128xf32, #tpu.memory_space<vmem>>, %arg5: memref<32x128xbf16, #tpu.memory_space<vmem>>, %arg6: memref<8x128xf32, #tpu.memory_space<vmem>>, %arg7: memref<8x8x128xf32, #tpu.memory_space<vmem>>, %arg8: memref<8x8x32xf32, #tpu.memory_space<vmem>>) attributes {dimension_semantics = [], scalar_prefetch = 0 : i64, scratch_operands = 2 : i64, tpu.core_type = #tpu.core_type<tc>} {
    %cst = arith.constant 0.000000e+00 : f32
    %0 = vector.broadcast %cst : f32 to vector<8x32xf32>
    %c0 = arith.constant 0 : index
    %c0_0 = arith.constant 0 : index
    %1 = vector.load %arg1[%c0, %c0_0] : memref<32x128xf32, #tpu.memory_space<vmem>>, vector<32x128xf32>
    %c0_i32 = arith.constant 0 : i32
    %2 = arith.index_cast %c0_i32 : i32 to index
    %c0_1 = arith.constant 0 : index
    %c0_2 = arith.constant 0 : index
    %3 = vector.load %arg0[%2, %c0_1, %c0_2] : memref<8x8x128xf32, #tpu.memory_space<vmem>>, vector<1x8x128xf32>
    %4 = vector.shape_cast %3 : vector<1x8x128xf32> to vector<8x128xf32>
    %cst_3 = arith.constant dense<0.000000e+00> : vector<8x128xf32>
    %5 = tpu.matmul %0, %1, %cst_3 {dimension_numbers = #tpu.dot_dimension_numbers<[1], [0], [0], [1], [0, 0, 1, 1], [], []>} : vector<8x32xf32>, vector<32x128xf32>, vector<8x128xf32> -> vector<8x128xf32>
    %6 = arith.addf %4, %5 : vector<8x128xf32>
    %7 = vector.extract_strided_slice %6 {offsets = [0, 0], sizes = [8, 96], strides = [1, 1]} : vector<8x128xf32> to vector<8x96xf32>
    %8 = arith.negf %7 : vector<8x96xf32>
    %9 = math.exp %8 : vector<8x96xf32>
    %cst_4 = arith.constant 1.000000e+00 : f32
    %10 = vector.broadcast %cst_4 : f32 to vector<8x96xf32>
    %11 = arith.addf %10, %9 : vector<8x96xf32>
    %12 = arith.divf %10, %11 : vector<8x96xf32>
    %13 = vector.extract_strided_slice %12 {offsets = [0, 32], sizes = [8, 32], strides = [1, 1]} : vector<8x96xf32> to vector<8x32xf32>
    %14 = arith.mulf %13, %0 : vector<8x32xf32>
    %15 = vector.extract_strided_slice %12 {offsets = [0, 0], sizes = [8, 32], strides = [1, 1]} : vector<8x96xf32> to vector<8x32xf32>
    %16 = vector.extract_strided_slice %6 {offsets = [0, 96], sizes = [8, 32], strides = [1, 1]} : vector<8x128xf32> to vector<8x32xf32>
    %17 = math.tanh %16 : vector<8x32xf32>
    %18 = arith.mulf %15, %17 : vector<8x32xf32>
    %19 = arith.addf %14, %18 : vector<8x32xf32>
    %20 = vector.extract_strided_slice %12 {offsets = [0, 64], sizes = [8, 32], strides = [1, 1]} : vector<8x96xf32> to vector<8x32xf32>
    %21 = math.tanh %19 : vector<8x32xf32>
    %22 = arith.mulf %20, %21 : vector<8x32xf32>
    %23 = arith.index_cast %c0_i32 : i32 to index
    %c0_5 = arith.constant 0 : index
    %c0_6 = arith.constant 0 : index
    %24 = vector.load %arg8[%23, %c0_5, %c0_6] : memref<8x8x32xf32, #tpu.memory_space<vmem>>, vector<1x8x32xf32>
    %25 = vector.shape_cast %24 : vector<1x8x32xf32> to vector<8x32xf32>
    %26 = vector.shape_cast %22 : vector<8x32xf32> to vector<1x8x32xf32>
    tpu.vector_store %arg8[%23, %c0_5, %c0_6], %26 {strides = array<i32>} : memref<8x8x32xf32, #tpu.memory_space<vmem>>, vector<1x8x32xf32>,
    %c1_i32 = arith.constant 1 : i32
    %27 = arith.index_cast %c1_i32 : i32 to index
    %c0_7 = arith.constant 0 : index
    %c0_8 = arith.constant 0 : index
    %28 = vector.load %arg0[%27, %c0_7, %c0_8] : memref<8x8x128xf32, #tpu.memory_space<vmem>>, vector<1x8x128xf32>
    %29 = vector.shape_cast %28 : vector<1x8x128xf32> to vector<8x128xf32>
    %cst_9 = arith.constant dense<0.000000e+00> : vector<8x128xf32>
    %30 = tpu.matmul %22, %1, %cst_9 {dimension_numbers = #tpu.dot_dimension_numbers<[1], [0], [0], [1], [0, 0, 1, 1], [], []>} : vector<8x32xf32>, vector<32x128xf32>, vector<8x128xf32> -> vector<8x128xf32>
    %31 = arith.addf %29, %30 : vector<8x128xf32>
    %32 = vector.extract_strided_slice %31 {offsets = [0, 0], sizes = [8, 96], strides = [1, 1]} : vector<8x128xf32> to vector<8x96xf32>
    %33 = arith.negf %32 : vector<8x96xf32>
    %34 = math.exp %33 : vector<8x96xf32>
    %cst_10 = arith.constant 1.000000e+00 : f32
    %35 = vector.broadcast %cst_10 : f32 to vector<8x96xf32>
    %36 = arith.addf %35, %34 : vector<8x96xf32>
    %37 = arith.divf %35, %36 : vector<8x96xf32>
    %38 = vector.extract_strided_slice %37 {offsets = [0, 32], sizes = [8, 32], strides = [1, 1]} : vector<8x96xf32> to vector<8x32xf32>
    %39 = arith.mulf %38, %19 : vector<8x32xf32>
    %40 = vector.extract_strided_slice %37 {offsets = [0, 0], sizes = [8, 32], strides = [1, 1]} : vector<8x96xf32> to vector<8x32xf32>
    %41 = vector.extract_strided_slice %31 {offsets = [0, 96], sizes = [8, 32], strides = [1, 1]} : vector<8x128xf32> to vector<8x32xf32>
    %42 = math.tanh %41 : vector<8x32xf32>
    %43 = arith.mulf %40, %42 : vector<8x32xf32>
    %44 = arith.addf %39, %43 : vector<8x32xf32>
    %45 = vector.extract_strided_slice %37 {offsets = [0, 64], sizes = [8, 32], strides = [1, 1]} : vector<8x96xf32> to vector<8x32xf32>
    %46 = math.tanh %44 : vector<8x32xf32>
    %47 = arith.mulf %45, %46 : vector<8x32xf32>
    %48 = arith.index_cast %c1_i32 : i32 to index
    %c0_11 = arith.constant 0 : index
    %c0_12 = arith.constant 0 : index
    %49 = vector.load %arg8[%48, %c0_11, %c0_12] : memref<8x8x32xf32, #tpu.memory_space<vmem>>, vector<1x8x32xf32>
    %50 = vector.shape_cast %49 : vector<1x8x32xf32> to vector<8x32xf32>
    %51 = vector.shape_cast %47 : vector<8x32xf32> to vector<1x8x32xf32>
    tpu.vector_store %arg8[%48, %c0_11, %c0_12], %51 {strides = array<i32>} : memref<8x8x32xf32, #tpu.memory_space<vmem>>, vector<1x8x32xf32>,
    %c2_i32 = arith.constant 2 : i32
    %52 = arith.index_cast %c2_i32 : i32 to index
    %c0_13 = arith.constant 0 : index
    %c0_14 = arith.constant 0 : index
    %53 = vector.load %arg0[%52, %c0_13, %c0_14] : memref<8x8x128xf32, #tpu.memory_space<vmem>>, vector<1x8x128xf32>
    %54 = vector.shape_cast %53 : vector<1x8x128xf32> to vector<8x128xf32>
    %cst_15 = arith.constant dense<0.000000e+00> : vector<8x128xf32>
    %55 = tpu.matmul %47, %1, %cst_15 {dimension_numbers = #tpu.dot_dimension_numbers<[1], [0], [0], [1], [0, 0, 1, 1], [], []>} : vector<8x32xf32>, vector<32x128xf32>, vector<8x128xf32> -> vector<8x128xf32>
    %56 = arith.addf %54, %55 : vector<8x128xf32>
    %57 = vector.extract_strided_slice %56 {offsets = [0, 0], sizes = [8, 96], strides = [1, 1]} : vector<8x128xf32> to vector<8x96xf32>
    %58 = arith.negf %57 : vector<8x96xf32>
    %59 = math.exp %58 : vector<8x96xf32>
    %cst_16 = arith.constant 1.000000e+00 : f32
    %60 = vector.broadcast %cst_16 : f32 to vector<8x96xf32>
    %61 = arith.addf %60, %59 : vector<8x96xf32>
    %62 = arith.divf %60, %61 : vector<8x96xf32>
    %63 = vector.extract_strided_slice %62 {offsets = [0, 32], sizes = [8, 32], strides = [1, 1]} : vector<8x96xf32> to vector<8x32xf32>
    %64 = arith.mulf %63, %44 : vector<8x32xf32>
    %65 = vector.extract_strided_slice %62 {offsets = [0, 0], sizes = [8, 32], strides = [1, 1]} : vector<8x96xf32> to vector<8x32xf32>
    %66 = vector.extract_strided_slice %56 {offsets = [0, 96], sizes = [8, 32], strides = [1, 1]} : vector<8x128xf32> to vector<8x32xf32>
    %67 = math.tanh %66 : vector<8x32xf32>
    %68 = arith.mulf %65, %67 : vector<8x32xf32>
    %69 = arith.addf %64, %68 : vector<8x32xf32>
    %70 = vector.extract_strided_slice %62 {offsets = [0, 64], sizes = [8, 32], strides = [1, 1]} : vector<8x96xf32> to vector<8x32xf32>
    %71 = math.tanh %69 : vector<8x32xf32>
    %72 = arith.mulf %70, %71 : vector<8x32xf32>
    %73 = arith.index_cast %c2_i32 : i32 to index
    %c0_17 = arith.constant 0 : index
    %c0_18 = arith.constant 0 : index
    %74 = vector.load %arg8[%73, %c0_17, %c0_18] : memref<8x8x32xf32, #tpu.memory_space<vmem>>, vector<1x8x32xf32>
    %75 = vector.shape_cast %74 : vector<1x8x32xf32> to vector<8x32xf32>
    %76 = vector.shape_cast %72 : vector<8x32xf32> to vector<1x8x32xf32>
    tpu.vector_store %arg8[%73, %c0_17, %c0_18], %76 {strides = array<i32>} : memref<8x8x32xf32, #tpu.memory_space<vmem>>, vector<1x8x32xf32>,
    %c3_i32 = arith.constant 3 : i32
    %77 = arith.index_cast %c3_i32 : i32 to index
    %c0_19 = arith.constant 0 : index
    %c0_20 = arith.constant 0 : index
    %78 = vector.load %arg0[%77, %c0_19, %c0_20] : memref<8x8x128xf32, #tpu.memory_space<vmem>>, vector<1x8x128xf32>
    %79 = vector.shape_cast %78 : vector<1x8x128xf32> to vector<8x128xf32>
    %cst_21 = arith.constant dense<0.000000e+00> : vector<8x128xf32>
    %80 = tpu.matmul %72, %1, %cst_21 {dimension_numbers = #tpu.dot_dimension_numbers<[1], [0], [0], [1], [0, 0, 1, 1], [], []>} : vector<8x32xf32>, vector<32x128xf32>, vector<8x128xf32> -> vector<8x128xf32>
    %81 = arith.addf %79, %80 : vector<8x128xf32>
    %82 = vector.extract_strided_slice %81 {offsets = [0, 0], sizes = [8, 96], strides = [1, 1]} : vector<8x128xf32> to vector<8x96xf32>
    %83 = arith.negf %82 : vector<8x96xf32>
    %84 = math.exp %83 : vector<8x96xf32>
    %cst_22 = arith.constant 1.000000e+00 : f32
    %85 = vector.broadcast %cst_22 : f32 to vector<8x96xf32>
    %86 = arith.addf %85, %84 : vector<8x96xf32>
    %87 = arith.divf %85, %86 : vector<8x96xf32>
    %88 = vector.extract_strided_slice %87 {offsets = [0, 32], sizes = [8, 32], strides = [1, 1]} : vector<8x96xf32> to vector<8x32xf32>
    %89 = arith.mulf %88, %69 : vector<8x32xf32>
    %90 = vector.extract_strided_slice %87 {offsets = [0, 0], sizes = [8, 32], strides = [1, 1]} : vector<8x96xf32> to vector<8x32xf32>
    %91 = vector.extract_strided_slice %81 {offsets = [0, 96], sizes = [8, 32], strides = [1, 1]} : vector<8x128xf32> to vector<8x32xf32>
    %92 = math.tanh %91 : vector<8x32xf32>
    %93 = arith.mulf %90, %92 : vector<8x32xf32>
    %94 = arith.addf %89, %93 : vector<8x32xf32>
    %95 = vector.extract_strided_slice %87 {offsets = [0, 64], sizes = [8, 32], strides = [1, 1]} : vector<8x96xf32> to vector<8x32xf32>
    %96 = math.tanh %94 : vector<8x32xf32>
    %97 = arith.mulf %95, %96 : vector<8x32xf32>
    %98 = arith.index_cast %c3_i32 : i32 to index
    %c0_23 = arith.constant 0 : index
    %c0_24 = arith.constant 0 : index
    %99 = vector.load %arg8[%98, %c0_23, %c0_24] : memref<8x8x32xf32, #tpu.memory_space<vmem>>, vector<1x8x32xf32>
    %100 = vector.shape_cast %99 : vector<1x8x32xf32> to vector<8x32xf32>
    %101 = vector.shape_cast %97 : vector<8x32xf32> to vector<1x8x32xf32>
    tpu.vector_store %arg8[%98, %c0_23, %c0_24], %101 {strides = array<i32>} : memref<8x8x32xf32, #tpu.memory_space<vmem>>, vector<1x8x32xf32>,
    %c4_i32 = arith.constant 4 : i32
    %102 = arith.index_cast %c4_i32 : i32 to index
    %c0_25 = arith.constant 0 : index
    %c0_26 = arith.constant 0 : index
    %103 = vector.load %arg0[%102, %c0_25, %c0_26] : memref<8x8x128xf32, #tpu.memory_space<vmem>>, vector<1x8x128xf32>
    %104 = vector.shape_cast %103 : vector<1x8x128xf32> to vector<8x128xf32>
    %cst_27 = arith.constant dense<0.000000e+00> : vector<8x128xf32>
    %105 = tpu.matmul %97, %1, %cst_27 {dimension_numbers = #tpu.dot_dimension_numbers<[1], [0], [0], [1], [0, 0, 1, 1], [], []>} : vector<8x32xf32>, vector<32x128xf32>, vector<8x128xf32> -> vector<8x128xf32>
    %106 = arith.addf %104, %105 : vector<8x128xf32>
    %107 = vector.extract_strided_slice %106 {offsets = [0, 0], sizes = [8, 96], strides = [1, 1]} : vector<8x128xf32> to vector<8x96xf32>
    %108 = arith.negf %107 : vector<8x96xf32>
    %109 = math.exp %108 : vector<8x96xf32>
    %cst_28 = arith.constant 1.000000e+00 : f32
    %110 = vector.broadcast %cst_28 : f32 to vector<8x96xf32>
    %111 = arith.addf %110, %109 : vector<8x96xf32>
    %112 = arith.divf %110, %111 : vector<8x96xf32>
    %113 = vector.extract_strided_slice %112 {offsets = [0, 32], sizes = [8, 32], strides = [1, 1]} : vector<8x96xf32> to vector<8x32xf32>
    %114 = arith.mulf %113, %94 : vector<8x32xf32>
    %115 = vector.extract_strided_slice %112 {offsets = [0, 0], sizes = [8, 32], strides = [1, 1]} : vector<8x96xf32> to vector<8x32xf32>
    %116 = vector.extract_strided_slice %106 {offsets = [0, 96], sizes = [8, 32], strides = [1, 1]} : vector<8x128xf32> to vector<8x32xf32>
    %117 = math.tanh %116 : vector<8x32xf32>
    %118 = arith.mulf %115, %117 : vector<8x32xf32>
    %119 = arith.addf %114, %118 : vector<8x32xf32>
    %120 = vector.extract_strided_slice %112 {offsets = [0, 64], sizes = [8, 32], strides = [1, 1]} : vector<8x96xf32> to vector<8x32xf32>
    %121 = math.tanh %119 : vector<8x32xf32>
    %122 = arith.mulf %120, %121 : vector<8x32xf32>
    %123 = arith.index_cast %c4_i32 : i32 to index
    %c0_29 = arith.constant 0 : index
    %c0_30 = arith.constant 0 : index
    %124 = vector.load %arg8[%123, %c0_29, %c0_30] : memref<8x8x32xf32, #tpu.memory_space<vmem>>, vector<1x8x32xf32>
    %125 = vector.shape_cast %124 : vector<1x8x32xf32> to vector<8x32xf32>
    %126 = vector.shape_cast %122 : vector<8x32xf32> to vector<1x8x32xf32>
    tpu.vector_store %arg8[%123, %c0_29, %c0_30], %126 {strides = array<i32>} : memref<8x8x32xf32, #tpu.memory_space<vmem>>, vector<1x8x32xf32>,
    %c5_i32 = arith.constant 5 : i32
    %127 = arith.index_cast %c5_i32 : i32 to index
    %c0_31 = arith.constant 0 : index
    %c0_32 = arith.constant 0 : index
    %128 = vector.load %arg0[%127, %c0_31, %c0_32] : memref<8x8x128xf32, #tpu.memory_space<vmem>>, vector<1x8x128xf32>
    %129 = vector.shape_cast %128 : vector<1x8x128xf32> to vector<8x128xf32>
    %cst_33 = arith.constant dense<0.000000e+00> : vector<8x128xf32>
    %130 = tpu.matmul %122, %1, %cst_33 {dimension_numbers = #tpu.dot_dimension_numbers<[1], [0], [0], [1], [0, 0, 1, 1], [], []>} : vector<8x32xf32>, vector<32x128xf32>, vector<8x128xf32> -> vector<8x128xf32>
    %131 = arith.addf %129, %130 : vector<8x128xf32>
    %132 = vector.extract_strided_slice %131 {offsets = [0, 0], sizes = [8, 96], strides = [1, 1]} : vector<8x128xf32> to vector<8x96xf32>
    %133 = arith.negf %132 : vector<8x96xf32>
    %134 = math.exp %133 : vector<8x96xf32>
    %cst_34 = arith.constant 1.000000e+00 : f32
    %135 = vector.broadcast %cst_34 : f32 to vector<8x96xf32>
    %136 = arith.addf %135, %134 : vector<8x96xf32>
    %137 = arith.divf %135, %136 : vector<8x96xf32>
    %138 = vector.extract_strided_slice %137 {offsets = [0, 32], sizes = [8, 32], strides = [1, 1]} : vector<8x96xf32> to vector<8x32xf32>
    %139 = arith.mulf %138, %119 : vector<8x32xf32>
    %140 = vector.extract_strided_slice %137 {offsets = [0, 0], sizes = [8, 32], strides = [1, 1]} : vector<8x96xf32> to vector<8x32xf32>
    %141 = vector.extract_strided_slice %131 {offsets = [0, 96], sizes = [8, 32], strides = [1, 1]} : vector<8x128xf32> to vector<8x32xf32>
    %142 = math.tanh %141 : vector<8x32xf32>
    %143 = arith.mulf %140, %142 : vector<8x32xf32>
    %144 = arith.addf %139, %143 : vector<8x32xf32>
    %145 = vector.extract_strided_slice %137 {offsets = [0, 64], sizes = [8, 32], strides = [1, 1]} : vector<8x96xf32> to vector<8x32xf32>
    %146 = math.tanh %144 : vector<8x32xf32>
    %147 = arith.mulf %145, %146 : vector<8x32xf32>
    %148 = arith.index_cast %c5_i32 : i32 to index
    %c0_35 = arith.constant 0 : index
    %c0_36 = arith.constant 0 : index
    %149 = vector.load %arg8[%148, %c0_35, %c0_36] : memref<8x8x32xf32, #tpu.memory_space<vmem>>, vector<1x8x32xf32>
    %150 = vector.shape_cast %149 : vector<1x8x32xf32> to vector<8x32xf32>
    %151 = vector.shape_cast %147 : vector<8x32xf32> to vector<1x8x32xf32>
    tpu.vector_store %arg8[%148, %c0_35, %c0_36], %151 {strides = array<i32>} : memref<8x8x32xf32, #tpu.memory_space<vmem>>, vector<1x8x32xf32>,
    %c6_i32 = arith.constant 6 : i32
    %152 = arith.index_cast %c6_i32 : i32 to index
    %c0_37 = arith.constant 0 : index
    %c0_38 = arith.constant 0 : index
    %153 = vector.load %arg0[%152, %c0_37, %c0_38] : memref<8x8x128xf32, #tpu.memory_space<vmem>>, vector<1x8x128xf32>
    %154 = vector.shape_cast %153 : vector<1x8x128xf32> to vector<8x128xf32>
    %cst_39 = arith.constant dense<0.000000e+00> : vector<8x128xf32>
    %155 = tpu.matmul %147, %1, %cst_39 {dimension_numbers = #tpu.dot_dimension_numbers<[1], [0], [0], [1], [0, 0, 1, 1], [], []>} : vector<8x32xf32>, vector<32x128xf32>, vector<8x128xf32> -> vector<8x128xf32>
    %156 = arith.addf %154, %155 : vector<8x128xf32>
    %157 = vector.extract_strided_slice %156 {offsets = [0, 0], sizes = [8, 96], strides = [1, 1]} : vector<8x128xf32> to vector<8x96xf32>
    %158 = arith.negf %157 : vector<8x96xf32>
    %159 = math.exp %158 : vector<8x96xf32>
    %cst_40 = arith.constant 1.000000e+00 : f32
    %160 = vector.broadcast %cst_40 : f32 to vector<8x96xf32>
    %161 = arith.addf %160, %159 : vector<8x96xf32>
    %162 = arith.divf %160, %161 : vector<8x96xf32>
    %163 = vector.extract_strided_slice %162 {offsets = [0, 32], sizes = [8, 32], strides = [1, 1]} : vector<8x96xf32> to vector<8x32xf32>
    %164 = arith.mulf %163, %144 : vector<8x32xf32>
    %165 = vector.extract_strided_slice %162 {offsets = [0, 0], sizes = [8, 32], strides = [1, 1]} : vector<8x96xf32> to vector<8x32xf32>
    %166 = vector.extract_strided_slice %156 {offsets = [0, 96], sizes = [8, 32], strides = [1, 1]} : vector<8x128xf32> to vector<8x32xf32>
    %167 = math.tanh %166 : vector<8x32xf32>
    %168 = arith.mulf %165, %167 : vector<8x32xf32>
    %169 = arith.addf %164, %168 : vector<8x32xf32>
    %170 = vector.extract_strided_slice %162 {offsets = [0, 64], sizes = [8, 32], strides = [1, 1]} : vector<8x96xf32> to vector<8x32xf32>
    %171 = math.tanh %169 : vector<8x32xf32>
    %172 = arith.mulf %170, %171 : vector<8x32xf32>
    %173 = arith.index_cast %c6_i32 : i32 to index
    %c0_41 = arith.constant 0 : index
    %c0_42 = arith.constant 0 : index
    %174 = vector.load %arg8[%173, %c0_41, %c0_42] : memref<8x8x32xf32, #tpu.memory_space<vmem>>, vector<1x8x32xf32>
    %175 = vector.shape_cast %174 : vector<1x8x32xf32> to vector<8x32xf32>
    %176 = vector.shape_cast %172 : vector<8x32xf32> to vector<1x8x32xf32>
    tpu.vector_store %arg8[%173, %c0_41, %c0_42], %176 {strides = array<i32>} : memref<8x8x32xf32, #tpu.memory_space<vmem>>, vector<1x8x32xf32>,
    %c7_i32 = arith.constant 7 : i32
    %177 = arith.index_cast %c7_i32 : i32 to index
    %c0_43 = arith.constant 0 : index
    %c0_44 = arith.constant 0 : index
    %178 = vector.load %arg0[%177, %c0_43, %c0_44] : memref<8x8x128xf32, #tpu.memory_space<vmem>>, vector<1x8x128xf32>
    %179 = vector.shape_cast %178 : vector<1x8x128xf32> to vector<8x128xf32>
    %cst_45 = arith.constant dense<0.000000e+00> : vector<8x128xf32>
    %180 = tpu.matmul %172, %1, %cst_45 {dimension_numbers = #tpu.dot_dimension_numbers<[1], [0], [0], [1], [0, 0, 1, 1], [], []>} : vector<8x32xf32>, vector<32x128xf32>, vector<8x128xf32> -> vector<8x128xf32>
    %181 = arith.addf %179, %180 : vector<8x128xf32>
    %182 = vector.extract_strided_slice %181 {offsets = [0, 0], sizes = [8, 96], strides = [1, 1]} : vector<8x128xf32> to vector<8x96xf32>
    %183 = arith.negf %182 : vector<8x96xf32>
    %184 = math.exp %183 : vector<8x96xf32>
    %cst_46 = arith.constant 1.000000e+00 : f32
    %185 = vector.broadcast %cst_46 : f32 to vector<8x96xf32>
    %186 = arith.addf %185, %184 : vector<8x96xf32>
    %187 = arith.divf %185, %186 : vector<8x96xf32>
    %188 = vector.extract_strided_slice %187 {offsets = [0, 32], sizes = [8, 32], strides = [1, 1]} : vector<8x96xf32> to vector<8x32xf32>
    %189 = arith.mulf %188, %169 : vector<8x32xf32>
    %190 = vector.extract_strided_slice %187 {offsets = [0, 0], sizes = [8, 32], strides = [1, 1]} : vector<8x96xf32> to vector<8x32xf32>
    %191 = vector.extract_strided_slice %181 {offsets = [0, 96], sizes = [8, 32], strides = [1, 1]} : vector<8x128xf32> to vector<8x32xf32>
    %192 = math.tanh %191 : vector<8x32xf32>
    %193 = arith.mulf %190, %192 : vector<8x32xf32>
    %194 = arith.addf %189, %193 : vector<8x32xf32>
    %195 = vector.extract_strided_slice %187 {offsets = [0, 64], sizes = [8, 32], strides = [1, 1]} : vector<8x96xf32> to vector<8x32xf32>
    %196 = math.tanh %194 : vector<8x32xf32>
    %197 = arith.mulf %195, %196 : vector<8x32xf32>
    %198 = arith.index_cast %c7_i32 : i32 to index
    %c0_47 = arith.constant 0 : index
    %c0_48 = arith.constant 0 : index
    %199 = vector.load %arg8[%198, %c0_47, %c0_48] : memref<8x8x32xf32, #tpu.memory_space<vmem>>, vector<1x8x32xf32>
    %200 = vector.shape_cast %199 : vector<1x8x32xf32> to vector<8x32xf32>
    %201 = vector.shape_cast %197 : vector<8x32xf32> to vector<1x8x32xf32>
    tpu.vector_store %arg8[%198, %c0_47, %c0_48], %201 {strides = array<i32>} : memref<8x8x32xf32, #tpu.memory_space<vmem>>, vector<1x8x32xf32>,
    %c8_i32 = arith.constant 8 : i32
    %c0_49 = arith.constant 0 : index
    %c0_50 = arith.constant 0 : index
    %202 = vector.load %arg2[%c0_49, %c0_50] : memref<32x128xbf16, #tpu.memory_space<vmem>>, vector<32x128xbf16>
    %c0_51 = arith.constant 0 : index
    %c0_52 = arith.constant 0 : index
    %203 = vector.load %arg3[%c0_51, %c0_52] : memref<32x128xf32, #tpu.memory_space<vmem>>, vector<32x128xf32>
    %c0_53 = arith.constant 0 : index
    %c0_54 = arith.constant 0 : index
    %204 = vector.load %arg4[%c0_53, %c0_54] : memref<1x128xf32, #tpu.memory_space<vmem>>, vector<1x128xf32>
    %c0_55 = arith.constant 0 : index
    %c0_56 = arith.constant 0 : index
    %c0_57 = arith.constant 0 : index
    %205 = vector.load %arg8[%c0_55, %c0_56, %c0_57] : memref<8x8x32xf32, #tpu.memory_space<vmem>>, vector<8x8x32xf32>
    %206 = vector.shape_cast %205 : vector<8x8x32xf32> to vector<64x32xf32>
    %207 = arith.truncf %206 : vector<64x32xf32> to vector<64x32xbf16>
    %cst_58 = arith.constant dense<0.000000e+00> : vector<64x128xf32>
    %208 = tpu.matmul %207, %202, %cst_58 {dimension_numbers = #tpu.dot_dimension_numbers<[1], [0], [0], [1], [0, 0, 1, 1], [], []>} : vector<64x32xbf16>, vector<32x128xbf16>, vector<64x128xf32> -> vector<64x128xf32>
    %209 = vector.broadcast %204 : vector<1x128xf32> to vector<64x128xf32>
    %210 = arith.addf %208, %209 : vector<64x128xf32>
    %211 = vector.shape_cast %210 : vector<64x128xf32> to vector<8x8x128xf32>
    %c0_59 = arith.constant 0 : index
    %c0_60 = arith.constant 0 : index
    %c0_61 = arith.constant 0 : index
    %212 = vector.load %arg7[%c0_59, %c0_60, %c0_61] : memref<8x8x128xf32, #tpu.memory_space<vmem>>, vector<8x8x128xf32>
    tpu.vector_store %arg7[%c0_59, %c0_60, %c0_61], %211 {strides = array<i32>} : memref<8x8x128xf32, #tpu.memory_space<vmem>>, vector<8x8x128xf32>,
    %c0_i32_62 = arith.constant 0 : i32
    %213 = arith.index_cast %c0_i32_62 : i32 to index
    %c0_63 = arith.constant 0 : index
    %c0_64 = arith.constant 0 : index
    %214 = vector.load %arg7[%213, %c0_63, %c0_64] : memref<8x8x128xf32, #tpu.memory_space<vmem>>, vector<1x8x128xf32>
    %215 = vector.shape_cast %214 : vector<1x8x128xf32> to vector<8x128xf32>
    %cst_65 = arith.constant dense<0.000000e+00> : vector<8x128xf32>
    %216 = tpu.matmul %0, %203, %cst_65 {dimension_numbers = #tpu.dot_dimension_numbers<[1], [0], [0], [1], [0, 0, 1, 1], [], []>} : vector<8x32xf32>, vector<32x128xf32>, vector<8x128xf32> -> vector<8x128xf32>
    %217 = arith.addf %215, %216 : vector<8x128xf32>
    %218 = vector.extract_strided_slice %217 {offsets = [0, 0], sizes = [8, 96], strides = [1, 1]} : vector<8x128xf32> to vector<8x96xf32>
    %219 = arith.negf %218 : vector<8x96xf32>
    %220 = math.exp %219 : vector<8x96xf32>
    %cst_66 = arith.constant 1.000000e+00 : f32
    %221 = vector.broadcast %cst_66 : f32 to vector<8x96xf32>
    %222 = arith.addf %221, %220 : vector<8x96xf32>
    %223 = arith.divf %221, %222 : vector<8x96xf32>
    %224 = vector.extract_strided_slice %223 {offsets = [0, 32], sizes = [8, 32], strides = [1, 1]} : vector<8x96xf32> to vector<8x32xf32>
    %225 = arith.mulf %224, %0 : vector<8x32xf32>
    %226 = vector.extract_strided_slice %223 {offsets = [0, 0], sizes = [8, 32], strides = [1, 1]} : vector<8x96xf32> to vector<8x32xf32>
    %227 = vector.extract_strided_slice %217 {offsets = [0, 96], sizes = [8, 32], strides = [1, 1]} : vector<8x128xf32> to vector<8x32xf32>
    %228 = math.tanh %227 : vector<8x32xf32>
    %229 = arith.mulf %226, %228 : vector<8x32xf32>
    %230 = arith.addf %225, %229 : vector<8x32xf32>
    %231 = vector.extract_strided_slice %223 {offsets = [0, 64], sizes = [8, 32], strides = [1, 1]} : vector<8x96xf32> to vector<8x32xf32>
    %232 = math.tanh %230 : vector<8x32xf32>
    %233 = arith.mulf %231, %232 : vector<8x32xf32>
    %c1_i32_67 = arith.constant 1 : i32
    %234 = arith.index_cast %c1_i32_67 : i32 to index
    %c0_68 = arith.constant 0 : index
    %c0_69 = arith.constant 0 : index
    %235 = vector.load %arg7[%234, %c0_68, %c0_69] : memref<8x8x128xf32, #tpu.memory_space<vmem>>, vector<1x8x128xf32>
    %236 = vector.shape_cast %235 : vector<1x8x128xf32> to vector<8x128xf32>
    %cst_70 = arith.constant dense<0.000000e+00> : vector<8x128xf32>
    %237 = tpu.matmul %233, %203, %cst_70 {dimension_numbers = #tpu.dot_dimension_numbers<[1], [0], [0], [1], [0, 0, 1, 1], [], []>} : vector<8x32xf32>, vector<32x128xf32>, vector<8x128xf32> -> vector<8x128xf32>
    %238 = arith.addf %236, %237 : vector<8x128xf32>
    %239 = vector.extract_strided_slice %238 {offsets = [0, 0], sizes = [8, 96], strides = [1, 1]} : vector<8x128xf32> to vector<8x96xf32>
    %240 = arith.negf %239 : vector<8x96xf32>
    %241 = math.exp %240 : vector<8x96xf32>
    %cst_71 = arith.constant 1.000000e+00 : f32
    %242 = vector.broadcast %cst_71 : f32 to vector<8x96xf32>
    %243 = arith.addf %242, %241 : vector<8x96xf32>
    %244 = arith.divf %242, %243 : vector<8x96xf32>
    %245 = vector.extract_strided_slice %244 {offsets = [0, 32], sizes = [8, 32], strides = [1, 1]} : vector<8x96xf32> to vector<8x32xf32>
    %246 = arith.mulf %245, %230 : vector<8x32xf32>
    %247 = vector.extract_strided_slice %244 {offsets = [0, 0], sizes = [8, 32], strides = [1, 1]} : vector<8x96xf32> to vector<8x32xf32>
    %248 = vector.extract_strided_slice %238 {offsets = [0, 96], sizes = [8, 32], strides = [1, 1]} : vector<8x128xf32> to vector<8x32xf32>
    %249 = math.tanh %248 : vector<8x32xf32>
    %250 = arith.mulf %247, %249 : vector<8x32xf32>
    %251 = arith.addf %246, %250 : vector<8x32xf32>
    %252 = vector.extract_strided_slice %244 {offsets = [0, 64], sizes = [8, 32], strides = [1, 1]} : vector<8x96xf32> to vector<8x32xf32>
    %253 = math.tanh %251 : vector<8x32xf32>
    %254 = arith.mulf %252, %253 : vector<8x32xf32>
    %c2_i32_72 = arith.constant 2 : i32
    %255 = arith.index_cast %c2_i32_72 : i32 to index
    %c0_73 = arith.constant 0 : index
    %c0_74 = arith.constant 0 : index
    %256 = vector.load %arg7[%255, %c0_73, %c0_74] : memref<8x8x128xf32, #tpu.memory_space<vmem>>, vector<1x8x128xf32>
    %257 = vector.shape_cast %256 : vector<1x8x128xf32> to vector<8x128xf32>
    %cst_75 = arith.constant dense<0.000000e+00> : vector<8x128xf32>
    %258 = tpu.matmul %254, %203, %cst_75 {dimension_numbers = #tpu.dot_dimension_numbers<[1], [0], [0], [1], [0, 0, 1, 1], [], []>} : vector<8x32xf32>, vector<32x128xf32>, vector<8x128xf32> -> vector<8x128xf32>
    %259 = arith.addf %257, %258 : vector<8x128xf32>
    %260 = vector.extract_strided_slice %259 {offsets = [0, 0], sizes = [8, 96], strides = [1, 1]} : vector<8x128xf32> to vector<8x96xf32>
    %261 = arith.negf %260 : vector<8x96xf32>
    %262 = math.exp %261 : vector<8x96xf32>
    %cst_76 = arith.constant 1.000000e+00 : f32
    %263 = vector.broadcast %cst_76 : f32 to vector<8x96xf32>
    %264 = arith.addf %263, %262 : vector<8x96xf32>
    %265 = arith.divf %263, %264 : vector<8x96xf32>
    %266 = vector.extract_strided_slice %265 {offsets = [0, 32], sizes = [8, 32], strides = [1, 1]} : vector<8x96xf32> to vector<8x32xf32>
    %267 = arith.mulf %266, %251 : vector<8x32xf32>
    %268 = vector.extract_strided_slice %265 {offsets = [0, 0], sizes = [8, 32], strides = [1, 1]} : vector<8x96xf32> to vector<8x32xf32>
    %269 = vector.extract_strided_slice %259 {offsets = [0, 96], sizes = [8, 32], strides = [1, 1]} : vector<8x128xf32> to vector<8x32xf32>
    %270 = math.tanh %269 : vector<8x32xf32>
    %271 = arith.mulf %268, %270 : vector<8x32xf32>
    %272 = arith.addf %267, %271 : vector<8x32xf32>
    %273 = vector.extract_strided_slice %265 {offsets = [0, 64], sizes = [8, 32], strides = [1, 1]} : vector<8x96xf32> to vector<8x32xf32>
    %274 = math.tanh %272 : vector<8x32xf32>
    %275 = arith.mulf %273, %274 : vector<8x32xf32>
    %c3_i32_77 = arith.constant 3 : i32
    %276 = arith.index_cast %c3_i32_77 : i32 to index
    %c0_78 = arith.constant 0 : index
    %c0_79 = arith.constant 0 : index
    %277 = vector.load %arg7[%276, %c0_78, %c0_79] : memref<8x8x128xf32, #tpu.memory_space<vmem>>, vector<1x8x128xf32>
    %278 = vector.shape_cast %277 : vector<1x8x128xf32> to vector<8x128xf32>
    %cst_80 = arith.constant dense<0.000000e+00> : vector<8x128xf32>
    %279 = tpu.matmul %275, %203, %cst_80 {dimension_numbers = #tpu.dot_dimension_numbers<[1], [0], [0], [1], [0, 0, 1, 1], [], []>} : vector<8x32xf32>, vector<32x128xf32>, vector<8x128xf32> -> vector<8x128xf32>
    %280 = arith.addf %278, %279 : vector<8x128xf32>
    %281 = vector.extract_strided_slice %280 {offsets = [0, 0], sizes = [8, 96], strides = [1, 1]} : vector<8x128xf32> to vector<8x96xf32>
    %282 = arith.negf %281 : vector<8x96xf32>
    %283 = math.exp %282 : vector<8x96xf32>
    %cst_81 = arith.constant 1.000000e+00 : f32
    %284 = vector.broadcast %cst_81 : f32 to vector<8x96xf32>
    %285 = arith.addf %284, %283 : vector<8x96xf32>
    %286 = arith.divf %284, %285 : vector<8x96xf32>
    %287 = vector.extract_strided_slice %286 {offsets = [0, 32], sizes = [8, 32], strides = [1, 1]} : vector<8x96xf32> to vector<8x32xf32>
    %288 = arith.mulf %287, %272 : vector<8x32xf32>
    %289 = vector.extract_strided_slice %286 {offsets = [0, 0], sizes = [8, 32], strides = [1, 1]} : vector<8x96xf32> to vector<8x32xf32>
    %290 = vector.extract_strided_slice %280 {offsets = [0, 96], sizes = [8, 32], strides = [1, 1]} : vector<8x128xf32> to vector<8x32xf32>
    %291 = math.tanh %290 : vector<8x32xf32>
    %292 = arith.mulf %289, %291 : vector<8x32xf32>
    %293 = arith.addf %288, %292 : vector<8x32xf32>
    %294 = vector.extract_strided_slice %286 {offsets = [0, 64], sizes = [8, 32], strides = [1, 1]} : vector<8x96xf32> to vector<8x32xf32>
    %295 = math.tanh %293 : vector<8x32xf32>
    %296 = arith.mulf %294, %295 : vector<8x32xf32>
    %c4_i32_82 = arith.constant 4 : i32
    %297 = arith.index_cast %c4_i32_82 : i32 to index
    %c0_83 = arith.constant 0 : index
    %c0_84 = arith.constant 0 : index
    %298 = vector.load %arg7[%297, %c0_83, %c0_84] : memref<8x8x128xf32, #tpu.memory_space<vmem>>, vector<1x8x128xf32>
    %299 = vector.shape_cast %298 : vector<1x8x128xf32> to vector<8x128xf32>
    %cst_85 = arith.constant dense<0.000000e+00> : vector<8x128xf32>
    %300 = tpu.matmul %296, %203, %cst_85 {dimension_numbers = #tpu.dot_dimension_numbers<[1], [0], [0], [1], [0, 0, 1, 1], [], []>} : vector<8x32xf32>, vector<32x128xf32>, vector<8x128xf32> -> vector<8x128xf32>
    %301 = arith.addf %299, %300 : vector<8x128xf32>
    %302 = vector.extract_strided_slice %301 {offsets = [0, 0], sizes = [8, 96], strides = [1, 1]} : vector<8x128xf32> to vector<8x96xf32>
    %303 = arith.negf %302 : vector<8x96xf32>
    %304 = math.exp %303 : vector<8x96xf32>
    %cst_86 = arith.constant 1.000000e+00 : f32
    %305 = vector.broadcast %cst_86 : f32 to vector<8x96xf32>
    %306 = arith.addf %305, %304 : vector<8x96xf32>
    %307 = arith.divf %305, %306 : vector<8x96xf32>
    %308 = vector.extract_strided_slice %307 {offsets = [0, 32], sizes = [8, 32], strides = [1, 1]} : vector<8x96xf32> to vector<8x32xf32>
    %309 = arith.mulf %308, %293 : vector<8x32xf32>
    %310 = vector.extract_strided_slice %307 {offsets = [0, 0], sizes = [8, 32], strides = [1, 1]} : vector<8x96xf32> to vector<8x32xf32>
    %311 = vector.extract_strided_slice %301 {offsets = [0, 96], sizes = [8, 32], strides = [1, 1]} : vector<8x128xf32> to vector<8x32xf32>
    %312 = math.tanh %311 : vector<8x32xf32>
    %313 = arith.mulf %310, %312 : vector<8x32xf32>
    %314 = arith.addf %309, %313 : vector<8x32xf32>
    %315 = vector.extract_strided_slice %307 {offsets = [0, 64], sizes = [8, 32], strides = [1, 1]} : vector<8x96xf32> to vector<8x32xf32>
    %316 = math.tanh %314 : vector<8x32xf32>
    %317 = arith.mulf %315, %316 : vector<8x32xf32>
    %c5_i32_87 = arith.constant 5 : i32
    %318 = arith.index_cast %c5_i32_87 : i32 to index
    %c0_88 = arith.constant 0 : index
    %c0_89 = arith.constant 0 : index
    %319 = vector.load %arg7[%318, %c0_88, %c0_89] : memref<8x8x128xf32, #tpu.memory_space<vmem>>, vector<1x8x128xf32>
    %320 = vector.shape_cast %319 : vector<1x8x128xf32> to vector<8x128xf32>
    %cst_90 = arith.constant dense<0.000000e+00> : vector<8x128xf32>
    %321 = tpu.matmul %317, %203, %cst_90 {dimension_numbers = #tpu.dot_dimension_numbers<[1], [0], [0], [1], [0, 0, 1, 1], [], []>} : vector<8x32xf32>, vector<32x128xf32>, vector<8x128xf32> -> vector<8x128xf32>
    %322 = arith.addf %320, %321 : vector<8x128xf32>
    %323 = vector.extract_strided_slice %322 {offsets = [0, 0], sizes = [8, 96], strides = [1, 1]} : vector<8x128xf32> to vector<8x96xf32>
    %324 = arith.negf %323 : vector<8x96xf32>
    %325 = math.exp %324 : vector<8x96xf32>
    %cst_91 = arith.constant 1.000000e+00 : f32
    %326 = vector.broadcast %cst_91 : f32 to vector<8x96xf32>
    %327 = arith.addf %326, %325 : vector<8x96xf32>
    %328 = arith.divf %326, %327 : vector<8x96xf32>
    %329 = vector.extract_strided_slice %328 {offsets = [0, 32], sizes = [8, 32], strides = [1, 1]} : vector<8x96xf32> to vector<8x32xf32>
    %330 = arith.mulf %329, %314 : vector<8x32xf32>
    %331 = vector.extract_strided_slice %328 {offsets = [0, 0], sizes = [8, 32], strides = [1, 1]} : vector<8x96xf32> to vector<8x32xf32>
    %332 = vector.extract_strided_slice %322 {offsets = [0, 96], sizes = [8, 32], strides = [1, 1]} : vector<8x128xf32> to vector<8x32xf32>
    %333 = math.tanh %332 : vector<8x32xf32>
    %334 = arith.mulf %331, %333 : vector<8x32xf32>
    %335 = arith.addf %330, %334 : vector<8x32xf32>
    %336 = vector.extract_strided_slice %328 {offsets = [0, 64], sizes = [8, 32], strides = [1, 1]} : vector<8x96xf32> to vector<8x32xf32>
    %337 = math.tanh %335 : vector<8x32xf32>
    %338 = arith.mulf %336, %337 : vector<8x32xf32>
    %c6_i32_92 = arith.constant 6 : i32
    %339 = arith.index_cast %c6_i32_92 : i32 to index
    %c0_93 = arith.constant 0 : index
    %c0_94 = arith.constant 0 : index
    %340 = vector.load %arg7[%339, %c0_93, %c0_94] : memref<8x8x128xf32, #tpu.memory_space<vmem>>, vector<1x8x128xf32>
    %341 = vector.shape_cast %340 : vector<1x8x128xf32> to vector<8x128xf32>
    %cst_95 = arith.constant dense<0.000000e+00> : vector<8x128xf32>
    %342 = tpu.matmul %338, %203, %cst_95 {dimension_numbers = #tpu.dot_dimension_numbers<[1], [0], [0], [1], [0, 0, 1, 1], [], []>} : vector<8x32xf32>, vector<32x128xf32>, vector<8x128xf32> -> vector<8x128xf32>
    %343 = arith.addf %341, %342 : vector<8x128xf32>
    %344 = vector.extract_strided_slice %343 {offsets = [0, 0], sizes = [8, 96], strides = [1, 1]} : vector<8x128xf32> to vector<8x96xf32>
    %345 = arith.negf %344 : vector<8x96xf32>
    %346 = math.exp %345 : vector<8x96xf32>
    %cst_96 = arith.constant 1.000000e+00 : f32
    %347 = vector.broadcast %cst_96 : f32 to vector<8x96xf32>
    %348 = arith.addf %347, %346 : vector<8x96xf32>
    %349 = arith.divf %347, %348 : vector<8x96xf32>
    %350 = vector.extract_strided_slice %349 {offsets = [0, 32], sizes = [8, 32], strides = [1, 1]} : vector<8x96xf32> to vector<8x32xf32>
    %351 = arith.mulf %350, %335 : vector<8x32xf32>
    %352 = vector.extract_strided_slice %349 {offsets = [0, 0], sizes = [8, 32], strides = [1, 1]} : vector<8x96xf32> to vector<8x32xf32>
    %353 = vector.extract_strided_slice %343 {offsets = [0, 96], sizes = [8, 32], strides = [1, 1]} : vector<8x128xf32> to vector<8x32xf32>
    %354 = math.tanh %353 : vector<8x32xf32>
    %355 = arith.mulf %352, %354 : vector<8x32xf32>
    %356 = arith.addf %351, %355 : vector<8x32xf32>
    %357 = vector.extract_strided_slice %349 {offsets = [0, 64], sizes = [8, 32], strides = [1, 1]} : vector<8x96xf32> to vector<8x32xf32>
    %358 = math.tanh %356 : vector<8x32xf32>
    %359 = arith.mulf %357, %358 : vector<8x32xf32>
    %c7_i32_97 = arith.constant 7 : i32
    %360 = arith.index_cast %c7_i32_97 : i32 to index
    %c0_98 = arith.constant 0 : index
    %c0_99 = arith.constant 0 : index
    %361 = vector.load %arg7[%360, %c0_98, %c0_99] : memref<8x8x128xf32, #tpu.memory_space<vmem>>, vector<1x8x128xf32>
    %362 = vector.shape_cast %361 : vector<1x8x128xf32> to vector<8x128xf32>
    %cst_100 = arith.constant dense<0.000000e+00> : vector<8x128xf32>
    %363 = tpu.matmul %359, %203, %cst_100 {dimension_numbers = #tpu.dot_dimension_numbers<[1], [0], [0], [1], [0, 0, 1, 1], [], []>} : vector<8x32xf32>, vector<32x128xf32>, vector<8x128xf32> -> vector<8x128xf32>
    %364 = arith.addf %362, %363 : vector<8x128xf32>
    %365 = vector.extract_strided_slice %364 {offsets = [0, 0], sizes = [8, 96], strides = [1, 1]} : vector<8x128xf32> to vector<8x96xf32>
    %366 = arith.negf %365 : vector<8x96xf32>
    %367 = math.exp %366 : vector<8x96xf32>
    %cst_101 = arith.constant 1.000000e+00 : f32
    %368 = vector.broadcast %cst_101 : f32 to vector<8x96xf32>
    %369 = arith.addf %368, %367 : vector<8x96xf32>
    %370 = arith.divf %368, %369 : vector<8x96xf32>
    %371 = vector.extract_strided_slice %370 {offsets = [0, 32], sizes = [8, 32], strides = [1, 1]} : vector<8x96xf32> to vector<8x32xf32>
    %372 = arith.mulf %371, %356 : vector<8x32xf32>
    %373 = vector.extract_strided_slice %370 {offsets = [0, 0], sizes = [8, 32], strides = [1, 1]} : vector<8x96xf32> to vector<8x32xf32>
    %374 = vector.extract_strided_slice %364 {offsets = [0, 96], sizes = [8, 32], strides = [1, 1]} : vector<8x128xf32> to vector<8x32xf32>
    %375 = math.tanh %374 : vector<8x32xf32>
    %376 = arith.mulf %373, %375 : vector<8x32xf32>
    %377 = arith.addf %372, %376 : vector<8x32xf32>
    %378 = vector.extract_strided_slice %370 {offsets = [0, 64], sizes = [8, 32], strides = [1, 1]} : vector<8x96xf32> to vector<8x32xf32>
    %379 = math.tanh %377 : vector<8x32xf32>
    %380 = arith.mulf %378, %379 : vector<8x32xf32>
    %c8_i32_102 = arith.constant 8 : i32
    %381 = arith.truncf %380 : vector<8x32xf32> to vector<8x32xbf16>
    %c0_103 = arith.constant 0 : index
    %c0_104 = arith.constant 0 : index
    %382 = vector.load %arg5[%c0_103, %c0_104] : memref<32x128xbf16, #tpu.memory_space<vmem>>, vector<32x128xbf16>
    %cst_105 = arith.constant dense<0.000000e+00> : vector<8x128xf32>
    %383 = tpu.matmul %381, %382, %cst_105 {dimension_numbers = #tpu.dot_dimension_numbers<[1], [0], [0], [1], [0, 0, 1, 1], [], []>} : vector<8x32xbf16>, vector<32x128xbf16>, vector<8x128xf32> -> vector<8x128xf32>
    %384 = arith.mulf %383, %383 : vector<8x128xf32>
    %cst_106 = arith.constant dense<0.000000e+00> : vector<8xf32>
    %385 = vector.multi_reduction <add>, %384, %cst_106 [1] : vector<8x128xf32> to vector<8xf32>
    %386 = vector.shape_cast %385 : vector<8xf32> to vector<8x1xf32>
    %387 = math.sqrt %386 : vector<8x1xf32>
    %cst_107 = arith.constant 9.99999996E-13 : f32
    %388 = vector.broadcast %cst_107 : f32 to vector<8x1xf32>
    %389 = arith.maximumf %387, %388 : vector<8x1xf32>
    %390 = vector.broadcast %389 : vector<8x1xf32> to vector<8x128xf32>
    %391 = arith.divf %383, %390 : vector<8x128xf32>
    %c0_108 = arith.constant 0 : index
    %c0_109 = arith.constant 0 : index
    %392 = vector.load %arg6[%c0_108, %c0_109] : memref<8x128xf32, #tpu.memory_space<vmem>>, vector<8x128xf32>
    tpu.vector_store %arg6[%c0_108, %c0_109], %391 {strides = array<i32>} : memref<8x128xf32, #tpu.memory_space<vmem>>, vector<8x128xf32>,
    return
  }
}

</mosaic_0001>

<llo_original>
// kernel: eeg_featnet_forward.1
$region0: #{eeg_featnet_forward.1}
  #allocation0 [shape = 'u32[]', space=smem, size = 0x4, offset = 0x4, fixed_abs, tag = 'smem constant byte address 0x4 - core index']
  #allocation1 [shape = 'u32[144,128]{1,0:T(1,128)}', space=vmem, size = 0x12000, scoped, tag = 'internal scratch']
  #allocation2 [shape = 'f32[8,8,128]{2,1,0:T(8,128)}', space=vmem, size = 0x8000, scoped, tag = 'scratch operand']
  #allocation3 [shape = 'f32[8,8,32]{2,1,0:T(8,128)}', space=vmem, size = 0x8000, scoped, tag = 'scratch operand']
  %s0 = inlined_call_operand.vmem [shape: f32[8,8,128], index: 0, kind: input, shape index: {}]
  %s1 = inlined_call_operand.vmem [shape: f32[32,128], index: 1, kind: input, shape index: {}]
  %s2 = inlined_call_operand.vmem [shape: bf16[32,128], index: 2, kind: input, shape index: {}]
  %s3 = inlined_call_operand.vmem [shape: f32[32,128], index: 3, kind: input, shape index: {}]
  %s4 = inlined_call_operand.vmem [shape: f32[1,128], index: 4, kind: input, shape index: {}]
  %s5 = inlined_call_operand.vmem [shape: bf16[32,128], index: 5, kind: input, shape index: {}]
  %s6 = inlined_call_operand.vmem [shape: f32[8,128], index: 6, kind: output, shape index: {}]
  %s7 = sld [smem:[#allocation0]]
  $region34: #{eeg_featnet_forward.1} parent=0
    _
  %s9 = ssub.s32 1, %s7
  %s10 = scalar_select 0, %s9, %s7
  // Predicated region
  $region2: #{eeg_featnet_forward.1} parent=0 // pred_check
    _
  $region3: #{eeg_featnet_forward.1} parent=0 // pred_check_branch
    %12 = sbr.rel (0) target = $region5
  $region4: #{eeg_featnet_forward.1} parent=0 // pred_region
    _
  $region5: #{eeg_featnet_forward.1} parent=0 // pred_fallthru
    _
  // Predicated region
  $region6: #{eeg_featnet_forward.1} parent=0 // pred_check
    _
  $region7: #{eeg_featnet_forward.1} parent=0 // pred_check_branch
    %14 = sbr.rel (0) target = $region9
  $region8: #{eeg_featnet_forward.1} parent=0 // pred_region
    _
  $region9: #{eeg_featnet_forward.1} parent=0 // pred_fallthru
    _
  // Predicated region
  $region10: #{eeg_featnet_forward.1} parent=0 // pred_check
    _
  $region11: #{eeg_featnet_forward.1} parent=0 // pred_check_branch
    %16 = sbr.rel (0) target = $region13
  $region12: #{eeg_featnet_forward.1} parent=0 // pred_region
    _
  $region13: #{eeg_featnet_forward.1} parent=0 // pred_fallthru
    _
  // Predicated region
  $region14: #{eeg_featnet_forward.1} parent=0 // pred_check
    _
  $region15: #{eeg_featnet_forward.1} parent=0 // pred_check_branch
    %18 = sbr.rel (0) target = $region17
  $region16: #{eeg_featnet_forward.1} parent=0 // pred_region
    _
  $region17: #{eeg_featnet_forward.1} parent=0 // pred_fallthru
    _
  // Predicated region
  $region18: #{eeg_featnet_forward.1} parent=0 // pred_check
    _
  $region19: #{eeg_featnet_forward.1} parent=0 // pred_check_branch
    %20 = sbr.rel (0) target = $region21
  $region20: #{eeg_featnet_forward.1} parent=0 // pred_region
    _
  $region21: #{eeg_featnet_forward.1} parent=0 // pred_fallthru
    _
  // Predicated region
  $region22: #{eeg_featnet_forward.1} parent=0 // pred_check
    _
  $region23: #{eeg_featnet_forward.1} parent=0 // pred_check_branch
    %22 = sbr.rel (0) target = $region25
  $region24: #{eeg_featnet_forward.1} parent=0 // pred_region
    _
  $region25: #{eeg_featnet_forward.1} parent=0 // pred_fallthru
    _
  %v24 = vld [vmem:[%s1] sm:$0xff]
  %v25 = vld [vmem:[%s1 + $0x8] sm:$0xff]
  %v26 = vld [vmem:[%s1 + $0x10] sm:$0xff]
  %v27 = vld [vmem:[%s1 + $0x18] sm:$0xff]
  %v28 = vld [vmem:[%s0] sm:$0xff]
  %vm29 = vcmask 261120
  %v31 = vsel %vm29, 0.0, 0
  %33 = vmatprep.subr.mxu0 0.0
  %34 = vmatpush1.msra.mxu0 %v24
  %35 = vmatprep.subr.mxu0 0.0
  %36 = vmatpush1.msra.mxu0 %v25
  %37 = vmatprep.subr.mxu0 0.0
  %38 = vmatpush1.msra.mxu0 %v26
  %39 = vmatprep.subr.mxu0 0.0
  %40 = vmatpush1.msra.mxu0 %v27
  %41 = vmatprep.subr.mxu0 0.0
  %42 = vmatpush1.msra.mxu0 0.0
  %43 = vmatprep.subr.mxu0 0.0
  %44 = vmatpush1.msra.mxu0 0.0
  %45 = vmatprep.subr.mxu0 0.0
  %46 = vmatpush1.msra.mxu0 0.0
  %47 = vmatprep.subr.mxu0 0.0
  %48 = vmatpush1.msra.mxu0 0.0
  %49 = vmatprep.subr.mxu0 0.0
  %50 = vmatpush1.msra.mxu0 0.0
  %51 = vmatprep.subr.mxu0 0.0
  %52 = vmatpush1.msra.mxu0 0.0
  %53 = vmatprep.subr.mxu0 0.0
  %54 = vmatpush1.msra.mxu0 0.0
  %55 = vmatprep.subr.mxu0 0.0
  %56 = vmatpush1.msra.mxu0 0.0
  %57 = vmatprep.subr.mxu0 0.0
  %58 = vmatpush1.msra.mxu0 0.0
  %59 = vmatprep.subr.mxu0 0.0
  %60 = vmatpush1.msra.mxu0 0.0
  %61 = vmatprep.subr.mxu0 0.0
  %62 = vmatpush1.msra.mxu0 0.0
  %63 = vmatprep.subr.mxu0 0.0
  %64 = vmatpush1.msra.mxu0 0.0
  %65 = vmatprep.subr.mxu0 0.0
  %66 = vmatpush1.msra.mxu0 0.0
  %67 = vmatprep.subr.mxu0 0.0
  %68 = vmatpush1.msra.mxu0 0.0
  %69 = vmatprep.subr.mxu0 0.0
  %70 = vmatpush1.msra.mxu0 0.0
  %71 = vmatprep.subr.mxu0 0.0
  %72 = vmatpush1.msra.mxu0 0.0
  %73 = vmatprep.subr.mxu0 0.0
  %74 = vmatpush1.msra.mxu0 0.0
  %75 = vmatprep.subr.mxu0 0.0
  %76 = vmatpush1.msra.mxu0 0.0
  %77 = vmatprep.subr.mxu0 0.0
  %78 = vmatpush1.msra.mxu0 0.0
  %79 = vmatprep.subr.mxu0 0.0
  %80 = vmatpush1.msra.mxu0 0.0
  %81 = vmatprep.subr.mxu0 0.0
  %82 = vmatpush1.msra.mxu0 0.0
  %83 = vmatprep.subr.mxu0 0.0
  %84 = vmatpush1.msra.mxu0 0.0
  %85 = vmatprep.subr.mxu0 0.0
  %86 = vmatpush1.msra.mxu0 0.0
  %87 = vmatprep.subr.mxu0 0.0
  %88 = vmatpush1.msra.mxu0 0.0
  %89 = vmatprep.subr.mxu0 0.0
  %90 = vmatpush1.msra.mxu0 0.0
  %91 = vmatprep.subr.mxu0 0.0
  %92 = vmatpush1.msra.mxu0 0.0
  %93 = vmatprep.subr.mxu0 0.0
  %94 = vmatpush1.msra.mxu0 0.0
  %95 = vmatprep.subr.mxu0 0.0
  %96 = vmatpush1.msra.mxu0 0.0
  %97 = vmatprep.mubr.f32.mxu0 0.0
  %98 = vmatmul.mubr.f32.gmra.mrb[0].mxu0 %v31
  %v99 = vpop.f32.mrb[0].mxu0
  %v100 = vadd.f32 0.0, %v99
  %v101 = vpop.f32.mrb[0].mxu0
  %102 = vdwg.mxu0
  %v103 = vadd.f32 %v28, %v100
  %v104 = vxor.u32 %v103, 2147483648
  %v105 = vmul.f32 %v104, 1.442695
  %v106 = vpow.pop %v105
  %v107 = vadd.f32 %v106, 1.0
  %v108 = vrcp.pop %v107
  %v109 = vmul.f32 1.0, %v108
  %v110 = vmul.f32 %v109, 0.0
  %v111 = vtanh.pop %v103
  %113 = vrot.lane.b32.xlu0 %v111, 32
  %v114 = vpop.permute.xlu0 %113
  %v116 = vmul.f32 %v109, %v114
  %118 = vrot.lane.b32.xlu0 %v116, 32
  %v119 = vpop.permute.xlu0 %118
  %v121 = vadd.f32 %v110, %v119
  %v122 = vtanh.pop %v121
  %124 = vrot.lane.b32.xlu0 %v122, 32
  %v125 = vpop.permute.xlu0 %124
  %v127 = vmul.f32 %v109, %v125
  %129 = vrot.lane.b32.xlu0 %v127, 64
  %v130 = vpop.permute.xlu0 %129
  %132 = vst.msk [vmem:[#allocation3] sm:$0xff] %vm29, %v130
  %s133 = scalar_lea.vmem %s0, 8
  %v134 = vld [vmem:[%s133] sm:$0xff]
  %v135 = vsel %vm29, %v130, 0
  %137 = vmatprep.subr.mxu0 0.0
  %138 = vmatpush1.msra.mxu0 %v24
  %139 = vmatprep.subr.mxu0 0.0
  %140 = vmatpush1.msra.mxu0 %v25
  %141 = vmatprep.subr.mxu0 0.0
  %142 = vmatpush1.msra.mxu0 %v26
  %143 = vmatprep.subr.mxu0 0.0
  %144 = vmatpush1.msra.mxu0 %v27
  %145 = vmatprep.subr.mxu0 0.0
  %146 = vmatpush1.msra.mxu0 0.0
  %147 = vmatprep.subr.mxu0 0.0
  %148 = vmatpush1.msra.mxu0 0.0
  %149 = vmatprep.subr.mxu0 0.0
  %150 = vmatpush1.msra.mxu0 0.0
  %151 = vmatprep.subr.mxu0 0.0
  %152 = vmatpush1.msra.mxu0 0.0
  %153 = vmatprep.subr.mxu0 0.0
  %154 = vmatpush1.msra.mxu0 0.0
  %155 = vmatprep.subr.mxu0 0.0
  %156 = vmatpush1.msra.mxu0 0.0
  %157 = vmatprep.subr.mxu0 0.0
  %158 = vmatpush1.msra.mxu0 0.0
  %159 = vmatprep.subr.mxu0 0.0
  %160 = vmatpush1.msra.mxu0 0.0
  %161 = vmatprep.subr.mxu0 0.0
  %162 = vmatpush1.msra.mxu0 0.0
  %163 = vmatprep.subr.mxu0 0.0
  %164 = vmatpush1.msra.mxu0 0.0
  %165 = vmatprep.subr.mxu0 0.0
  %166 = vmatpush1.msra.mxu0 0.0
  %167 = vmatprep.subr.mxu0 0.0
  %168 = vmatpush1.msra.mxu0 0.0
  %169 = vmatprep.subr.mxu0 0.0
  %170 = vmatpush1.msra.mxu0 0.0
  %171 = vmatprep.subr.mxu0 0.0
  %172 = vmatpush1.msra.mxu0 0.0
  %173 = vmatprep.subr.mxu0 0.0
  %174 = vmatpush1.msra.mxu0 0.0
  %175 = vmatprep.subr.mxu0 0.0
  %176 = vmatpush1.msra.mxu0 0.0
  %177 = vmatprep.subr.mxu0 0.0
  %178 = vmatpush1.msra.mxu0 0.0
  %179 = vmatprep.subr.mxu0 0.0
  %180 = vmatpush1.msra.mxu0 0.0
  %181 = vmatprep.subr.mxu0 0.0
  %182 = vmatpush1.msra.mxu0 0.0
  %183 = vmatprep.subr.mxu0 0.0
  %184 = vmatpush1.msra.mxu0 0.0
  %185 = vmatprep.subr.mxu0 0.0
  %186 = vmatpush1.msra.mxu0 0.0
  %187 = vmatprep.subr.mxu0 0.0
  %188 = vmatpush1.msra.mxu0 0.0
  %189 = vmatprep.subr.mxu0 0.0
  %190 = vmatpush1.msra.mxu0 0.0
  %191 = vmatprep.subr.mxu0 0.0
  %192 = vmatpush1.msra.mxu0 0.0
  %193 = vmatprep.subr.mxu0 0.0
  %194 = vmatpush1.msra.mxu0 0.0
  %195 = vmatprep.subr.mxu0 0.0
  %196 = vmatpush1.msra.mxu0 0.0
  %197 = vmatprep.subr.mxu0 0.0
  %198 = vmatpush1.msra.mxu0 0.0
  %199 = vmatprep.subr.mxu0 0.0
  %200 = vmatpush1.msra.mxu0 0.0
  %201 = vmatprep.mubr.f32.mxu0 0.0
  %202 = vmatmul.mubr.f32.gmra.mrb[0].mxu0 %v135
  %v203 = vpop.f32.mrb[0].mxu0
  %v204 = vadd.f32 0.0, %v203
  %v205 = vpop.f32.mrb[0].mxu0
  %206 = vdwg.mxu0
  %v207 = vadd.f32 %v134, %v204
  %v208 = vxor.u32 %v207, 2147483648
  %v209 = vmul.f32 %v208, 1.442695
  %v210 = vpow.pop %v209
  %v211 = vadd.f32 %v210, 1.0
  %v212 = vrcp.pop %v211
  %v213 = vmul.f32 1.0, %v212
  %v214 = vmul.f32 %v213, %v121
  %v215 = vtanh.pop %v207
  %217 = vrot.lane.b32.xlu0 %v215, 32
  %v218 = vpop.permute.xlu0 %217
  %v220 = vmul.f32 %v213, %v218
  %222 = vrot.lane.b32.xlu0 %v220, 32
  %v223 = vpop.permute.xlu0 %222
  %v225 = vadd.f32 %v214, %v223
  %v226 = vtanh.pop %v225
  %228 = vrot.lane.b32.xlu0 %v226, 32
  %v229 = vpop.permute.xlu0 %228
  %v231 = vmul.f32 %v213, %v229
  %233 = vrot.lane.b32.xlu0 %v231, 64
  %v234 = vpop.permute.xlu0 %233
  %s236 = scalar_lea.vmem [#allocation3], 8
  %237 = vst.msk [vmem:[%s236] sm:$0xff] %vm29, %v234
  %s238 = scalar_lea.vmem %s0, 16
  %v239 = vld [vmem:[%s238] sm:$0xff]
  %v240 = vsel %vm29, %v234, 0
  %242 = vmatprep.subr.mxu0 0.0
  %243 = vmatpush1.msra.mxu0 %v24
  %244 = vmatprep.subr.mxu0 0.0
  %245 = vmatpush1.msra.mxu0 %v25
  %246 = vmatprep.subr.mxu0 0.0
  %247 = vmatpush1.msra.mxu0 %v26
  %248 = vmatprep.subr.mxu0 0.0
  %249 = vmatpush1.msra.mxu0 %v27
  %250 = vmatprep.subr.mxu0 0.0
  %251 = vmatpush1.msra.mxu0 0.0
  %252 = vmatprep.subr.mxu0 0.0
  %253 = vmatpush1.msra.mxu0 0.0
  %254 = vmatprep.subr.mxu0 0.0
  %255 = vmatpush1.msra.mxu0 0.0
  %256 = vmatprep.subr.mxu0 0.0
  %257 = vmatpush1.msra.mxu0 0.0
  %258 = vmatprep.subr.mxu0 0.0
  %259 = vmatpush1.msra.mxu0 0.0
  %260 = vmatprep.subr.mxu0 0.0
  %261 = vmatpush1.msra.mxu0 0.0
  %262 = vmatprep.subr.mxu0 0.0
  %263 = vmatpush1.msra.mxu0 0.0
  %264 = vmatprep.subr.mxu0 0.0
  %265 = vmatpush1.msra.mxu0 0.0
  %266 = vmatprep.subr.mxu0 0.0
  %267 = vmatpush1.msra.mxu0 0.0
  %268 = vmatprep.subr.mxu0 0.0
  %269 = vmatpush1.msra.mxu0 0.0
  %270 = vmatprep.subr.mxu0 0.0
  %271 = vmatpush1.msra.mxu0 0.0
  %272 = vmatprep.subr.mxu0 0.0
  %273 = vmatpush1.msra.mxu0 0.0
  %274 = vmatprep.subr.mxu0 0.0
  %275 = vmatpush1.msra.mxu0 0.0
  %276 = vmatprep.subr.mxu0 0.0
  %277 = vmatpush1.msra.mxu0 0.0
  %278 = vmatprep.subr.mxu0 0.0
  %279 = vmatpush1.msra.mxu0 0.0
  %280 = vmatprep.subr.mxu0 0.0
  %281 = vmatpush1.msra.mxu0 0.0
  %282 = vmatprep.subr.mxu0 0.0
  %283 = vmatpush1.msra.mxu0 0.0
  %284 = vmatprep.subr.mxu0 0.0
  %285 = vmatpush1.msra.mxu0 0.0
  %286 = vmatprep.subr.mxu0 0.0
  %287 = vmatpush1.msra.mxu0 0.0
  %288 = vmatprep.subr.mxu0 0.0
  %289 = vmatpush1.msra.mxu0 0.0
  %290 = vmatprep.subr.mxu0 0.0
  %291 = vmatpush1.msra.mxu0 0.0
  %292 = vmatprep.subr.mxu0 0.0
  %293 = vmatpush1.msra.mxu0 0.0
  %294 = vmatprep.subr.mxu0 0.0
  %295 = vmatpush1.msra.mxu0 0.0
  %296 = vmatprep.subr.mxu0 0.0
  %297 = vmatpush1.msra.mxu0 0.0
  %298 = vmatprep.subr.mxu0 0.0
  %299 = vmatpush1.msra.mxu0 0.0
  %300 = vmatprep.subr.mxu0 0.0
  %301 = vmatpush1.msra.mxu0 0.0
  %302 = vmatprep.subr.mxu0 0.0
  %303 = vmatpush1.msra.mxu0 0.0
  %304 = vmatprep.subr.mxu0 0.0
  %305 = vmatpush1.msra.mxu0 0.0
  %306 = vmatprep.mubr.f32.mxu0 0.0
  %307 = vmatmul.mubr.f32.gmra.mrb[0].mxu0 %v240
  %v308 = vpop.f32.mrb[0].mxu0
  %v309 = vadd.f32 0.0, %v308
  %v310 = vpop.f32.mrb[0].mxu0
  %311 = vdwg.mxu0
  %v312 = vadd.f32 %v239, %v309
  %v313 = vxor.u32 %v312, 2147483648
  %v314 = vmul.f32 %v313, 1.442695
  %v315 = vpow.pop %v314
  %v316 = vadd.f32 %v315, 1.0
  %v317 = vrcp.pop %v316
  %v318 = vmul.f32 1.0, %v317
  %v319 = vmul.f32 %v318, %v225
  %v320 = vtanh.pop %v312
  %322 = vrot.lane.b32.xlu0 %v320, 32
  %v323 = vpop.permute.xlu0 %322
  %v325 = vmul.f32 %v318, %v323
  %327 = vrot.lane.b32.xlu0 %v325, 32
  %v328 = vpop.permute.xlu0 %327
  %v330 = vadd.f32 %v319, %v328
  %v331 = vtanh.pop %v330
  %333 = vrot.lane.b32.xlu0 %v331, 32
  %v334 = vpop.permute.xlu0 %333
  %v336 = vmul.f32 %v318, %v334
  %338 = vrot.lane.b32.xlu0 %v336, 64
  %v339 = vpop.permute.xlu0 %338
  %s341 = scalar_lea.vmem [#allocation3], 16
  %342 = vst.msk [vmem:[%s341] sm:$0xff] %vm29, %v339
  %s343 = scalar_lea.vmem %s0, 24
  %v344 = vld [vmem:[%s343] sm:$0xff]
  %v345 = vsel %vm29, %v339, 0
  %347 = vmatprep.subr.mxu0 0.0
  %348 = vmatpush1.msra.mxu0 %v24
  %349 = vmatprep.subr.mxu0 0.0
  %350 = vmatpush1.msra.mxu0 %v25
  %351 = vmatprep.subr.mxu0 0.0
  %352 = vmatpush1.msra.mxu0 %v26
  %353 = vmatprep.subr.mxu0 0.0
  %354 = vmatpush1.msra.mxu0 %v27
  %355 = vmatprep.subr.mxu0 0.0
  %356 = vmatpush1.msra.mxu0 0.0
  %357 = vmatprep.subr.mxu0 0.0
  %358 = vmatpush1.msra.mxu0 0.0
  %359 = vmatprep.subr.mxu0 0.0
  %360 = vmatpush1.msra.mxu0 0.0
  %361 = vmatprep.subr.mxu0 0.0
  %362 = vmatpush1.msra.mxu0 0.0
  %363 = vmatprep.subr.mxu0 0.0
  %364 = vmatpush1.msra.mxu0 0.0
  %365 = vmatprep.subr.mxu0 0.0
  %366 = vmatpush1.msra.mxu0 0.0
  %367 = vmatprep.subr.mxu0 0.0
  %368 = vmatpush1.msra.mxu0 0.0
  %369 = vmatprep.subr.mxu0 0.0
  %370 = vmatpush1.msra.mxu0 0.0
  %371 = vmatprep.subr.mxu0 0.0
  %372 = vmatpush1.msra.mxu0 0.0
  %373 = vmatprep.subr.mxu0 0.0
  %374 = vmatpush1.msra.mxu0 0.0
  %375 = vmatprep.subr.mxu0 0.0
  %376 = vmatpush1.msra.mxu0 0.0
  %377 = vmatprep.subr.mxu0 0.0
  %378 = vmatpush1.msra.mxu0 0.0
  %379 = vmatprep.subr.mxu0 0.0
  %380 = vmatpush1.msra.mxu0 0.0
  %381 = vmatprep.subr.mxu0 0.0
  %382 = vmatpush1.msra.mxu0 0.0
  %383 = vmatprep.subr.mxu0 0.0
  %384 = vmatpush1.msra.mxu0 0.0
  %385 = vmatprep.subr.mxu0 0.0
  %386 = vmatpush1.msra.mxu0 0.0
  %387 = vmatprep.subr.mxu0 0.0
  %388 = vmatpush1.msra.mxu0 0.0
  %389 = vmatprep.subr.mxu0 0.0
  %390 = vmatpush1.msra.mxu0 0.0
  %391 = vmatprep.subr.mxu0 0.0
  %392 = vmatpush1.msra.mxu0 0.0
  %393 = vmatprep.subr.mxu0 0.0
  %394 = vmatpush1.msra.mxu0 0.0
  %395 = vmatprep.subr.mxu0 0.0
  %396 = vmatpush1.msra.mxu0 0.0
  %397 = vmatprep.subr.mxu0 0.0
  %398 = vmatpush1.msra.mxu0 0.0
  %399 = vmatprep.subr.mxu0 0.0
  %400 = vmatpush1.msra.mxu0 0.0
  %401 = vmatprep.subr.mxu0 0.0
  %402 = vmatpush1.msra.mxu0 0.0
  %403 = vmatprep.subr.mxu0 0.0
  %404 = vmatpush1.msra.mxu0 0.0
  %405 = vmatprep.subr.mxu0 0.0
  %406 = vmatpush1.msra.mxu0 0.0
  %407 = vmatprep.subr.mxu0 0.0
  %408 = vmatpush1.msra.mxu0 0.0
  %409 = vmatprep.subr.mxu0 0.0
  %410 = vmatpush1.msra.mxu0 0.0
  %411 = vmatprep.mubr.f32.mxu0 0.0
  %412 = vmatmul.mubr.f32.gmra.mrb[0].mxu0 %v345
  %v413 = vpop.f32.mrb[0].mxu0
  %v414 = vadd.f32 0.0, %v413
  %v415 = vpop.f32.mrb[0].mxu0
  %416 = vdwg.mxu0
  %v417 = vadd.f32 %v344, %v414
  %v418 = vxor.u32 %v417, 2147483648
  %v419 = vmul.f32 %v418, 1.442695
  %v420 = vpow.pop %v419
  %v421 = vadd.f32 %v420, 1.0
  %v422 = vrcp.pop %v421
  %v423 = vmul.f32 1.0, %v422
  %v424 = vmul.f32 %v423, %v330
  %v425 = vtanh.pop %v417
  %427 = vrot.lane.b32.xlu0 %v425, 32
  %v428 = vpop.permute.xlu0 %427
  %v430 = vmul.f32 %v423, %v428
  %432 = vrot.lane.b32.xlu0 %v430, 32
  %v433 = vpop.permute.xlu0 %432
  %v435 = vadd.f32 %v424, %v433
  %v436 = vtanh.pop %v435
  %438 = vrot.lane.b32.xlu0 %v436, 32
  %v439 = vpop.permute.xlu0 %438
  %v441 = vmul.f32 %v423, %v439
  %443 = vrot.lane.b32.xlu0 %v441, 64
  %v444 = vpop.permute.xlu0 %443
  %s446 = scalar_lea.vmem [#allocation3], 24
  %447 = vst.msk [vmem:[%s446] sm:$0xff] %vm29, %v444
  %s448 = scalar_lea.vmem %s0, 32
  %v449 = vld [vmem:[%s448] sm:$0xff]
  %v450 = vsel %vm29, %v444, 0
  %452 = vmatprep.subr.mxu0 0.0
  %453 = vmatpush1.msra.mxu0 %v24
  %454 = vmatprep.subr.mxu0 0.0
  %455 = vmatpush1.msra.mxu0 %v25
  %456 = vmatprep.subr.mxu0 0.0
  %457 = vmatpush1.msra.mxu0 %v26
  %458 = vmatprep.subr.mxu0 0.0
  %459 = vmatpush1.msra.mxu0 %v27
  %460 = vmatprep.subr.mxu0 0.0
  %461 = vmatpush1.msra.mxu0 0.0
  %462 = vmatprep.subr.mxu0 0.0
  %463 = vmatpush1.msra.mxu0 0.0
  %464 = vmatprep.subr.mxu0 0.0
  %465 = vmatpush1.msra.mxu0 0.0
  %466 = vmatprep.subr.mxu0 0.0
  %467 = vmatpush1.msra.mxu0 0.0
  %468 = vmatprep.subr.mxu0 0.0
  %469 = vmatpush1.msra.mxu0 0.0
  %470 = vmatprep.subr.mxu0 0.0
  %471 = vmatpush1.msra.mxu0 0.0
  %472 = vmatprep.subr.mxu0 0.0
  %473 = vmatpush1.msra.mxu0 0.0
  %474 = vmatprep.subr.mxu0 0.0
  %475 = vmatpush1.msra.mxu0 0.0
  %476 = vmatprep.subr.mxu0 0.0
  %477 = vmatpush1.msra.mxu0 0.0
  %478 = vmatprep.subr.mxu0 0.0
  %479 = vmatpush1.msra.mxu0 0.0
  %480 = vmatprep.subr.mxu0 0.0
  %481 = vmatpush1.msra.mxu0 0.0
  %482 = vmatprep.subr.mxu0 0.0
  %483 = vmatpush1.msra.mxu0 0.0
  %484 = vmatprep.subr.mxu0 0.0
  %485 = vmatpush1.msra.mxu0 0.0
  %486 = vmatprep.subr.mxu0 0.0
  %487 = vmatpush1.msra.mxu0 0.0
  %488 = vmatprep.subr.mxu0 0.0
  %489 = vmatpush1.msra.mxu0 0.0
  %490 = vmatprep.subr.mxu0 0.0
  %491 = vmatpush1.msra.mxu0 0.0
  %492 = vmatprep.subr.mxu0 0.0
  %493 = vmatpush1.msra.mxu0 0.0
  %494 = vmatprep.subr.mxu0 0.0
  %495 = vmatpush1.msra.mxu0 0.0
  %496 = vmatprep.subr.mxu0 0.0
  %497 = vmatpush1.msra.mxu0 0.0
  %498 = vmatprep.subr.mxu0 0.0
  %499 = vmatpush1.msra.mxu0 0.0
  %500 = vmatprep.subr.mxu0 0.0
  %501 = vmatpush1.msra.mxu0 0.0
  %502 = vmatprep.subr.mxu0 0.0
  %503 = vmatpush1.msra.mxu0 0.0
  %504 = vmatprep.subr.mxu0 0.0
  %505 = vmatpush1.msra.mxu0 0.0
  %506 = vmatprep.subr.mxu0 0.0
  %507 = vmatpush1.msra.mxu0 0.0
  %508 = vmatprep.subr.mxu0 0.0
  %509 = vmatpush1.msra.mxu0 0.0
  %510 = vmatprep.subr.mxu0 0.0
  %511 = vmatpush1.msra.mxu0 0.0
  %512 = vmatprep.subr.mxu0 0.0
  %513 = vmatpush1.msra.mxu0 0.0
  %514 = vmatprep.subr.mxu0 0.0
  %515 = vmatpush1.msra.mxu0 0.0
  %516 = vmatprep.mubr.f32.mxu0 0.0
  %517 = vmatmul.mubr.f32.gmra.mrb[0].mxu0 %v450
  %v518 = vpop.f32.mrb[0].mxu0
  %v519 = vadd.f32 0.0, %v518
  %v520 = vpop.f32.mrb[0].mxu0
  %521 = vdwg.mxu0
  %v522 = vadd.f32 %v449, %v519
  %v523 = vxor.u32 %v522, 2147483648
  %v524 = vmul.f32 %v523, 1.442695
  %v525 = vpow.pop %v524
  %v526 = vadd.f32 %v525, 1.0
  %v527 = vrcp.pop %v526
  %v528 = vmul.f32 1.0, %v527
  %v529 = vmul.f32 %v528, %v435
  %v530 = vtanh.pop %v522
  %532 = vrot.lane.b32.xlu0 %v530, 32
  %v533 = vpop.permute.xlu0 %532
  %v535 = vmul.f32 %v528, %v533
  %537 = vrot.lane.b32.xlu0 %v535, 32
  %v538 = vpop.permute.xlu0 %537
  %v540 = vadd.f32 %v529, %v538
  %v541 = vtanh.pop %v540
  %543 = vrot.lane.b32.xlu0 %v541, 32
  %v544 = vpop.permute.xlu0 %543
  %v546 = vmul.f32 %v528, %v544
  %548 = vrot.lane.b32.xlu0 %v546, 64
  %v549 = vpop.permute.xlu0 %548
  %s551 = scalar_lea.vmem [#allocation3], 32
  %552 = vst.msk [vmem:[%s551] sm:$0xff] %vm29, %v549
  %s553 = scalar_lea.vmem %s0, 40
  %v554 = vld [vmem:[%s553] sm:$0xff]
  %v555 = vsel %vm29, %v549, 0
  %557 = vmatprep.subr.mxu0 0.0
  %558 = vmatpush1.msra.mxu0 %v24
  %559 = vmatprep.subr.mxu0 0.0
  %560 = vmatpush1.msra.mxu0 %v25
  %561 = vmatprep.subr.mxu0 0.0
  %562 = vmatpush1.msra.mxu0 %v26
  %563 = vmatprep.subr.mxu0 0.0
  %564 = vmatpush1.msra.mxu0 %v27
  %565 = vmatprep.subr.mxu0 0.0
  %566 = vmatpush1.msra.mxu0 0.0
  %567 = vmatprep.subr.mxu0 0.0
  %568 = vmatpush1.msra.mxu0 0.0
  %569 = vmatprep.subr.mxu0 0.0
  %570 = vmatpush1.msra.mxu0 0.0
  %571 = vmatprep.subr.mxu0 0.0
  %572 = vmatpush1.msra.mxu0 0.0
  %573 = vmatprep.subr.mxu0 0.0
  %574 = vmatpush1.msra.mxu0 0.0
  %575 = vmatprep.subr.mxu0 0.0
  %576 = vmatpush1.msra.mxu0 0.0
  %577 = vmatprep.subr.mxu0 0.0
  %578 = vmatpush1.msra.mxu0 0.0
  %579 = vmatprep.subr.mxu0 0.0
  %580 = vmatpush1.msra.mxu0 0.0
  %581 = vmatprep.subr.mxu0 0.0
  %582 = vmatpush1.msra.mxu0 0.0
  %583 = vmatprep.subr.mxu0 0.0
  %584 = vmatpush1.msra.mxu0 0.0
  %585 = vmatprep.subr.mxu0 0.0
  %586 = vmatpush1.msra.mxu0 0.0
  %587 = vmatprep.subr.mxu0 0.0
  %588 = vmatpush1.msra.mxu0 0.0
  %589 = vmatprep.subr.mxu0 0.0
  %590 = vmatpush1.msra.mxu0 0.0
  %591 = vmatprep.subr.mxu0 0.0
  %592 = vmatpush1.msra.mxu0 0.0
  %593 = vmatprep.subr.mxu0 0.0
  %594 = vmatpush1.msra.mxu0 0.0
  %595 = vmatprep.subr.mxu0 0.0
  %596 = vmatpush1.msra.mxu0 0.0
  %597 = vmatprep.subr.mxu0 0.0
  %598 = vmatpush1.msra.mxu0 0.0
  %599 = vmatprep.subr.mxu0 0.0
  %600 = vmatpush1.msra.mxu0 0.0
  %601 = vmatprep.subr.mxu0 0.0
  %602 = vmatpush1.msra.mxu0 0.0
  %603 = vmatprep.subr.mxu0 0.0
  %604 = vmatpush1.msra.mxu0 0.0
  %605 = vmatprep.subr.mxu0 0.0
  %606 = vmatpush1.msra.mxu0 0.0
  %607 = vmatprep.subr.mxu0 0.0
  %608 = vmatpush1.msra.mxu0 0.0
  %609 = vmatprep.subr.mxu0 0.0
  %610 = vmatpush1.msra.mxu0 0.0
  %611 = vmatprep.subr.mxu0 0.0
  %612 = vmatpush1.msra.mxu0 0.0
  %613 = vmatprep.subr.mxu0 0.0
  %614 = vmatpush1.msra.mxu0 0.0
  %615 = vmatprep.subr.mxu0 0.0
  %616 = vmatpush1.msra.mxu0 0.0
  %617 = vmatprep.subr.mxu0 0.0
  %618 = vmatpush1.msra.mxu0 0.0
  %619 = vmatprep.subr.mxu0 0.0
  %620 = vmatpush1.msra.mxu0 0.0
  %621 = vmatprep.mubr.f32.mxu0 0.0
  %622 = vmatmul.mubr.f32.gmra.mrb[0].mxu0 %v555
  %v623 = vpop.f32.mrb[0].mxu0
  %v624 = vadd.f32 0.0, %v623
  %v625 = vpop.f32.mrb[0].mxu0
  %626 = vdwg.mxu0
  %v627 = vadd.f32 %v554, %v624
  %v628 = vxor.u32 %v627, 2147483648
  %v629 = vmul.f32 %v628, 1.442695
  %v630 = vpow.pop %v629
  %v631 = vadd.f32 %v630, 1.0
  %v632 = vrcp.pop %v631
  %v633 = vmul.f32 1.0, %v632
  %v634 = vmul.f32 %v633, %v540
  %v635 = vtanh.pop %v627
  %637 = vrot.lane.b32.xlu0 %v635, 32
  %v638 = vpop.permute.xlu0 %637
  %v640 = vmul.f32 %v633, %v638
  %642 = vrot.lane.b32.xlu0 %v640, 32
  %v643 = vpop.permute.xlu0 %642
  %v645 = vadd.f32 %v634, %v643
  %v646 = vtanh.pop %v645
  %648 = vrot.lane.b32.xlu0 %v646, 32
  %v649 = vpop.permute.xlu0 %648
  %v651 = vmul.f32 %v633, %v649
  %653 = vrot.lane.b32.xlu0 %v651, 64
  %v654 = vpop.permute.xlu0 %653
  %s656 = scalar_lea.vmem [#allocation3], 40
  %657 = vst.msk [vmem:[%s656] sm:$0xff] %vm29, %v654
  %s658 = scalar_lea.vmem %s0, 48
  %v659 = vld [vmem:[%s658] sm:$0xff]
  %v660 = vsel %vm29, %v654, 0
  %662 = vmatprep.subr.mxu0 0.0
  %663 = vmatpush1.msra.mxu0 %v24
  %664 = vmatprep.subr.mxu0 0.0
  %665 = vmatpush1.msra.mxu0 %v25
  %666 = vmatprep.subr.mxu0 0.0
  %667 = vmatpush1.msra.mxu0 %v26
  %668 = vmatprep.subr.mxu0 0.0
  %669 = vmatpush1.msra.mxu0 %v27
  %670 = vmatprep.subr.mxu0 0.0
  %671 = vmatpush1.msra.mxu0 0.0
  %672 = vmatprep.subr.mxu0 0.0
  %673 = vmatpush1.msra.mxu0 0.0
  %674 = vmatprep.subr.mxu0 0.0
  %675 = vmatpush1.msra.mxu0 0.0
  %676 = vmatprep.subr.mxu0 0.0
  %677 = vmatpush1.msra.mxu0 0.0
  %678 = vmatprep.subr.mxu0 0.0
  %679 = vmatpush1.msra.mxu0 0.0
  %680 = vmatprep.subr.mxu0 0.0
  %681 = vmatpush1.msra.mxu0 0.0
  %682 = vmatprep.subr.mxu0 0.0
  %683 = vmatpush1.msra.mxu0 0.0
  %684 = vmatprep.subr.mxu0 0.0
  %685 = vmatpush1.msra.mxu0 0.0
  %686 = vmatprep.subr.mxu0 0.0
  %687 = vmatpush1.msra.mxu0 0.0
  %688 = vmatprep.subr.mxu0 0.0
  %689 = vmatpush1.msra.mxu0 0.0
  %690 = vmatprep.subr.mxu0 0.0
  %691 = vmatpush1.msra.mxu0 0.0
  %692 = vmatprep.subr.mxu0 0.0
  %693 = vmatpush1.msra.mxu0 0.0
  %694 = vmatprep.subr.mxu0 0.0
  %695 = vmatpush1.msra.mxu0 0.0
  %696 = vmatprep.subr.mxu0 0.0
  %697 = vmatpush1.msra.mxu0 0.0
  %698 = vmatprep.subr.mxu0 0.0
  %699 = vmatpush1.msra.mxu0 0.0
  %700 = vmatprep.subr.mxu0 0.0
  %701 = vmatpush1.msra.mxu0 0.0
  %702 = vmatprep.subr.mxu0 0.0
  %703 = vmatpush1.msra.mxu0 0.0
  %704 = vmatprep.subr.mxu0 0.0
  %705 = vmatpush1.msra.mxu0 0.0
  %706 = vmatprep.subr.mxu0 0.0
  %707 = vmatpush1.msra.mxu0 0.0
  %708 = vmatprep.subr.mxu0 0.0
  %709 = vmatpush1.msra.mxu0 0.0
  %710 = vmatprep.subr.mxu0 0.0
  %711 = vmatpush1.msra.mxu0 0.0
  %712 = vmatprep.subr.mxu0 0.0
  %713 = vmatpush1.msra.mxu0 0.0
  %714 = vmatprep.subr.mxu0 0.0
  %715 = vmatpush1.msra.mxu0 0.0
  %716 = vmatprep.subr.mxu0 0.0
  %717 = vmatpush1.msra.mxu0 0.0
  %718 = vmatprep.subr.mxu0 0.0
  %719 = vmatpush1.msra.mxu0 0.0
  %720 = vmatprep.subr.mxu0 0.0
  %721 = vmatpush1.msra.mxu0 0.0
  %722 = vmatprep.subr.mxu0 0.0
  %723 = vmatpush1.msra.mxu0 0.0
  %724 = vmatprep.subr.mxu0 0.0
  %725 = vmatpush1.msra.mxu0 0.0
  %726 = vmatprep.mubr.f32.mxu0 0.0
  %727 = vmatmul.mubr.f32.gmra.mrb[0].mxu0 %v660
  %v728 = vpop.f32.mrb[0].mxu0
  %v729 = vadd.f32 0.0, %v728
  %v730 = vpop.f32.mrb[0].mxu0
  %731 = vdwg.mxu0
  %v732 = vadd.f32 %v659, %v729
  %v733 = vxor.u32 %v732, 2147483648
  %v734 = vmul.f32 %v733, 1.442695
  %v735 = vpow.pop %v734
  %v736 = vadd.f32 %v735, 1.0
  %v737 = vrcp.pop %v736
  %v738 = vmul.f32 1.0, %v737
  %v739 = vmul.f32 %v738, %v645
  %v740 = vtanh.pop %v732
  %742 = vrot.lane.b32.xlu0 %v740, 32
  %v743 = vpop.permute.xlu0 %742
  %v745 = vmul.f32 %v738, %v743
  %747 = vrot.lane.b32.xlu0 %v745, 32
  %v748 = vpop.permute.xlu0 %747
  %v750 = vadd.f32 %v739, %v748
  %v751 = vtanh.pop %v750
  %753 = vrot.lane.b32.xlu0 %v751, 32
  %v754 = vpop.permute.xlu0 %753
  %v756 = vmul.f32 %v738, %v754
  %758 = vrot.lane.b32.xlu0 %v756, 64
  %v759 = vpop.permute.xlu0 %758
  %s761 = scalar_lea.vmem [#allocation3], 48
  %762 = vst.msk [vmem:[%s761] sm:$0xff] %vm29, %v759
  %s763 = scalar_lea.vmem %s0, 56
  %v764 = vld [vmem:[%s763] sm:$0xff]
  %v765 = vsel %vm29, %v759, 0
  %767 = vmatprep.subr.mxu0 0.0
  %768 = vmatpush1.msra.mxu0 %v24
  %769 = vmatprep.subr.mxu0 0.0
  %770 = vmatpush1.msra.mxu0 %v25
  %771 = vmatprep.subr.mxu0 0.0
  %772 = vmatpush1.msra.mxu0 %v26
  %773 = vmatprep.subr.mxu0 0.0
  %774 = vmatpush1.msra.mxu0 %v27
  %775 = vmatprep.subr.mxu0 0.0
  %776 = vmatpush1.msra.mxu0 0.0
  %777 = vmatprep.subr.mxu0 0.0
  %778 = vmatpush1.msra.mxu0 0.0
  %779 = vmatprep.subr.mxu0 0.0
  %780 = vmatpush1.msra.mxu0 0.0
  %781 = vmatprep.subr.mxu0 0.0
  %782 = vmatpush1.msra.mxu0 0.0
  %783 = vmatprep.subr.mxu0 0.0
  %784 = vmatpush1.msra.mxu0 0.0
  %785 = vmatprep.subr.mxu0 0.0
  %786 = vmatpush1.msra.mxu0 0.0
  %787 = vmatprep.subr.mxu0 0.0
  %788 = vmatpush1.msra.mxu0 0.0
  %789 = vmatprep.subr.mxu0 0.0
  %790 = vmatpush1.msra.mxu0 0.0
  %791 = vmatprep.subr.mxu0 0.0
  %792 = vmatpush1.msra.mxu0 0.0
  %793 = vmatprep.subr.mxu0 0.0
  %794 = vmatpush1.msra.mxu0 0.0
  %795 = vmatprep.subr.mxu0 0.0
  %796 = vmatpush1.msra.mxu0 0.0
  %797 = vmatprep.subr.mxu0 0.0
  %798 = vmatpush1.msra.mxu0 0.0
  %799 = vmatprep.subr.mxu0 0.0
  %800 = vmatpush1.msra.mxu0 0.0
  %801 = vmatprep.subr.mxu0 0.0
  %802 = vmatpush1.msra.mxu0 0.0
  %803 = vmatprep.subr.mxu0 0.0
  %804 = vmatpush1.msra.mxu0 0.0
  %805 = vmatprep.subr.mxu0 0.0
  %806 = vmatpush1.msra.mxu0 0.0
  %807 = vmatprep.subr.mxu0 0.0
  %808 = vmatpush1.msra.mxu0 0.0
  %809 = vmatprep.subr.mxu0 0.0
  %810 = vmatpush1.msra.mxu0 0.0
  %811 = vmatprep.subr.mxu0 0.0
  %812 = vmatpush1.msra.mxu0 0.0
  %813 = vmatprep.subr.mxu0 0.0
  %814 = vmatpush1.msra.mxu0 0.0
  %815 = vmatprep.subr.mxu0 0.0
  %816 = vmatpush1.msra.mxu0 0.0
  %817 = vmatprep.subr.mxu0 0.0
  %818 = vmatpush1.msra.mxu0 0.0
  %819 = vmatprep.subr.mxu0 0.0
  %820 = vmatpush1.msra.mxu0 0.0
  %821 = vmatprep.subr.mxu0 0.0
  %822 = vmatpush1.msra.mxu0 0.0
  %823 = vmatprep.subr.mxu0 0.0
  %824 = vmatpush1.msra.mxu0 0.0
  %825 = vmatprep.subr.mxu0 0.0
  %826 = vmatpush1.msra.mxu0 0.0
  %827 = vmatprep.subr.mxu0 0.0
  %828 = vmatpush1.msra.mxu0 0.0
  %829 = vmatprep.subr.mxu0 0.0
  %830 = vmatpush1.msra.mxu0 0.0
  %831 = vmatprep.mubr.f32.mxu0 0.0
  %832 = vmatmul.mubr.f32.gmra.mrb[0].mxu0 %v765
  %v833 = vpop.f32.mrb[0].mxu0
  %v834 = vadd.f32 0.0, %v833
  %v835 = vpop.f32.mrb[0].mxu0
  %836 = vdwg.mxu0
  %v837 = vadd.f32 %v764, %v834
  %v838 = vxor.u32 %v837, 2147483648
  %v839 = vmul.f32 %v838, 1.442695
  %v840 = vpow.pop %v839
  %v841 = vadd.f32 %v840, 1.0
  %v842 = vrcp.pop %v841
  %v843 = vmul.f32 1.0, %v842
  %v844 = vmul.f32 %v843, %v750
  %v845 = vtanh.pop %v837
  %847 = vrot.lane.b32.xlu0 %v845, 32
  %v848 = vpop.permute.xlu0 %847
  %v850 = vmul.f32 %v843, %v848
  %852 = vrot.lane.b32.xlu0 %v850, 32
  %v853 = vpop.permute.xlu0 %852
  %v855 = vadd.f32 %v844, %v853
  %v856 = vtanh.pop %v855
  %858 = vrot.lane.b32.xlu0 %v856, 32
  %v859 = vpop.permute.xlu0 %858
  %v861 = vmul.f32 %v843, %v859
  %863 = vrot.lane.b32.xlu0 %v861, 64
  %v864 = vpop.permute.xlu0 %863
  %s866 = scalar_lea.vmem [#allocation3], 56
  %867 = vst.msk [vmem:[%s866] sm:$0xff] %vm29, %v864
  %v868 = vld [vmem:[%s2] sm:$0xf]
  %v869 = vld [vmem:[%s2 + $0x4] sm:$0xf]
  %v870 = vld [vmem:[%s2 + $0x8] sm:$0xf]
  %v871 = vld [vmem:[%s2 + $0xc] sm:$0xf]
  %v872 = vld [vmem:[%s3] sm:$0xff]
  %v873 = vld [vmem:[%s3 + $0x8] sm:$0xff]
  %v874 = vld [vmem:[%s3 + $0x10] sm:$0xff]
  %v875 = vld [vmem:[%s3 + $0x18] sm:$0xff]
  %v876 = vld [vmem:[%s4] sm:$0x1]
  %v877 = vld [vmem:[#allocation3] sm:$0xff]
  %v878 = vld [vmem:[#allocation3 + $0x8] sm:$0xff]
  %v879 = vld [vmem:[#allocation3 + $0x10] sm:$0xff]
  %v880 = vld [vmem:[#allocation3 + $0x18] sm:$0xff]
  %v881 = vld [vmem:[#allocation3 + $0x20] sm:$0xff]
  %v882 = vld [vmem:[#allocation3 + $0x28] sm:$0xff]
  %v883 = vld [vmem:[#allocation3 + $0x30] sm:$0xff]
  %v884 = vld [vmem:[#allocation3 + $0x38] sm:$0xff]
  %v885 = vpack.c.bf16 %v878, %v877
  %v886 = vpack.c.bf16 %v880, %v879
  %v887 = vpack.c.bf16 %v882, %v881
  %v888 = vpack.c.bf16 %v884, %v883
  %v890 = vlaneseq
  %v891 = vshrl.u32 %v890, 7
  %v892 = vsub.s32 0, %v891
  %v893 = vrot.slane %v876, %v892
  %v899 = vunpack.c.l.b16 %v868
  %v900 = vunpack.c.l.b16 %v869
  %v901 = vunpack.c.l.b16 %v870
  %v902 = vunpack.c.l.b16 %v871
  %v903 = vpack.c.b16 %v900, %v899
  %v904 = vpack.c.b16 %v902, %v901
  %v908 = vsel %vm29, %v885, 0
  %v911 = vsel %vm29, %v886, 0
  %v914 = vsel %vm29, %v887, 0
  %v917 = vsel %vm29, %v888, 0
  %919 = vmatprep.subr.bf16.mxu0 0
  %920 = vmatpush1.bf16.msra.mxu0 %v903
  %921 = vmatprep.subr.bf16.mxu0 0
  %922 = vmatpush1.bf16.msra.mxu0 %v904
  %923 = vmatprep.subr.bf16.mxu0 0
  %924 = vmatpush1.bf16.msra.mxu0 0
  %925 = vmatprep.subr.bf16.mxu0 0
  %926 = vmatpush1.bf16.msra.mxu0 0
  %927 = vmatprep.subr.bf16.mxu0 0
  %928 = vmatpush1.bf16.msra.mxu0 0
  %929 = vmatprep.subr.bf16.mxu0 0
  %930 = vmatpush1.bf16.msra.mxu0 0
  %931 = vmatprep.subr.bf16.mxu0 0
  %932 = vmatpush1.bf16.msra.mxu0 0
  %933 = vmatprep.subr.bf16.mxu0 0
  %934 = vmatpush1.bf16.msra.mxu0 0
  %935 = vmatprep.subr.bf16.mxu0 0
  %936 = vmatpush1.bf16.msra.mxu0 0
  %937 = vmatprep.subr.bf16.mxu0 0
  %938 = vmatpush1.bf16.msra.mxu0 0
  %939 = vmatprep.subr.bf16.mxu0 0
  %940 = vmatpush1.bf16.msra.mxu0 0
  %941 = vmatprep.subr.bf16.mxu0 0
  %942 = vmatpush1.bf16.msra.mxu0 0
  %943 = vmatprep.subr.bf16.mxu0 0
  %944 = vmatpush1.bf16.msra.mxu0 0
  %945 = vmatprep.subr.bf16.mxu0 0
  %946 = vmatpush1.bf16.msra.mxu0 0
  %947 = vmatprep.subr.bf16.mxu0 0
  %948 = vmatpush1.bf16.msra.mxu0 0
  %949 = vmatprep.subr.bf16.mxu0 0
  %950 = vmatpush1.bf16.msra.mxu0 0
  %951 = vmatprep.mubr.bf16.mxu0 0
  %952 = vmatmul.mubr.bf16.gmra.mrb[0].mxu0 %v908
  %v953 = vpop.f32.mrb[0].mxu0
  %v954 = vadd.f32 %v893, %v953
  %v955 = vpop.f32.mrb[0].mxu0
  %v956 = vpop.f32.mrb[0].mxu0
  %v957 = vadd.f32 %v893, %v956
  %v958 = vpop.f32.mrb[0].mxu0
  %959 = vmatprep.mubr.bf16.mxu0 0
  %960 = vmatmul.mubr.bf16.gmra.mrb[0].mxu0 %v911
  %v961 = vpop.f32.mrb[0].mxu0
  %v962 = vadd.f32 %v893, %v961
  %v963 = vpop.f32.mrb[0].mxu0
  %v964 = vpop.f32.mrb[0].mxu0
  %v965 = vadd.f32 %v893, %v964
  %v966 = vpop.f32.mrb[0].mxu0
  %967 = vmatprep.mubr.bf16.mxu0 0
  %968 = vmatmul.mubr.bf16.gmra.mrb[0].mxu0 %v914
  %v969 = vpop.f32.mrb[0].mxu0
  %v970 = vadd.f32 %v893, %v969
  %v971 = vpop.f32.mrb[0].mxu0
  %v972 = vpop.f32.mrb[0].mxu0
  %v973 = vadd.f32 %v893, %v972
  %v974 = vpop.f32.mrb[0].mxu0
  %975 = vmatprep.mubr.bf16.mxu0 0
  %976 = vmatmul.mubr.bf16.gmra.mrb[0].mxu0 %v917
  %v977 = vpop.f32.mrb[0].mxu0
  %v978 = vadd.f32 %v893, %v977
  %v979 = vpop.f32.mrb[0].mxu0
  %v980 = vpop.f32.mrb[0].mxu0
  %v981 = vadd.f32 %v893, %v980
  %v982 = vpop.f32.mrb[0].mxu0
  %983 = vdwg.mxu0
  %984 = vst [vmem:[#allocation2] sm:$0xff] %v954
  %985 = vst [vmem:[#allocation2 + $0x8] sm:$0xff] %v957
  %986 = vst [vmem:[#allocation2 + $0x10] sm:$0xff] %v962
  %987 = vst [vmem:[#allocation2 + $0x18] sm:$0xff] %v965
  %988 = vst [vmem:[#allocation2 + $0x20] sm:$0xff] %v970
  %989 = vst [vmem:[#allocation2 + $0x28] sm:$0xff] %v973
  %990 = vst [vmem:[#allocation2 + $0x30] sm:$0xff] %v978
  %991 = vst [vmem:[#allocation2 + $0x38] sm:$0xff] %v981
  %v992 = vld [vmem:[#allocation2] sm:$0xff]
  %993 = vmatprep.subr.mxu0 0.0
  %994 = vmatpush1.msra.mxu0 %v872
  %995 = vmatprep.subr.mxu0 0.0
  %996 = vmatpush1.msra.mxu0 %v873
  %997 = vmatprep.subr.mxu0 0.0
  %998 = vmatpush1.msra.mxu0 %v874
  %999 = vmatprep.subr.mxu0 0.0
  %1000 = vmatpush1.msra.mxu0 %v875
  %1001 = vmatprep.subr.mxu0 0.0
  %1002 = vmatpush1.msra.mxu0 0.0
  %1003 = vmatprep.subr.mxu0 0.0
  %1004 = vmatpush1.msra.mxu0 0.0
  %1005 = vmatprep.subr.mxu0 0.0
  %1006 = vmatpush1.msra.mxu0 0.0
  %1007 = vmatprep.subr.mxu0 0.0
  %1008 = vmatpush1.msra.mxu0 0.0
  %1009 = vmatprep.subr.mxu0 0.0
  %1010 = vmatpush1.msra.mxu0 0.0
  %1011 = vmatprep.subr.mxu0 0.0
  %1012 = vmatpush1.msra.mxu0 0.0
  %1013 = vmatprep.subr.mxu0 0.0
  %1014 = vmatpush1.msra.mxu0 0.0
  %1015 = vmatprep.subr.mxu0 0.0
  %1016 = vmatpush1.msra.mxu0 0.0
  %1017 = vmatprep.subr.mxu0 0.0
  %1018 = vmatpush1.msra.mxu0 0.0
  %1019 = vmatprep.subr.mxu0 0.0
  %1020 = vmatpush1.msra.mxu0 0.0
  %1021 = vmatprep.subr.mxu0 0.0
  %1022 = vmatpush1.msra.mxu0 0.0
  %1023 = vmatprep.subr.mxu0 0.0
  %1024 = vmatpush1.msra.mxu0 0.0
  %1025 = vmatprep.subr.mxu0 0.0
  %1026 = vmatpush1.msra.mxu0 0.0
  %1027 = vmatprep.subr.mxu0 0.0
  %1028 = vmatpush1.msra.mxu0 0.0
  %1029 = vmatprep.subr.mxu0 0.0
  %1030 = vmatpush1.msra.mxu0 0.0
  %1031 = vmatprep.subr.mxu0 0.0
  %1032 = vmatpush1.msra.mxu0 0.0
  %1033 = vmatprep.subr.mxu0 0.0
  %1034 = vmatpush1.msra.mxu0 0.0
  %1035 = vmatprep.subr.mxu0 0.0
  %1036 = vmatpush1.msra.mxu0 0.0
  %1037 = vmatprep.subr.mxu0 0.0
  %1038 = vmatpush1.msra.mxu0 0.0
  %1039 = vmatprep.subr.mxu0 0.0
  %1040 = vmatpush1.msra.mxu0 0.0
  %1041 = vmatprep.subr.mxu0 0.0
  %1042 = vmatpush1.msra.mxu0 0.0
  %1043 = vmatprep.subr.mxu0 0.0
  %1044 = vmatpush1.msra.mxu0 0.0
  %1045 = vmatprep.subr.mxu0 0.0
  %1046 = vmatpush1.msra.mxu0 0.0
  %1047 = vmatprep.subr.mxu0 0.0
  %1048 = vmatpush1.msra.mxu0 0.0
  %1049 = vmatprep.subr.mxu0 0.0
  %1050 = vmatpush1.msra.mxu0 0.0
  %1051 = vmatprep.subr.mxu0 0.0
  %1052 = vmatpush1.msra.mxu0 0.0
  %1053 = vmatprep.subr.mxu0 0.0
  %1054 = vmatpush1.msra.mxu0 0.0
  %1055 = vmatprep.subr.mxu0 0.0
  %1056 = vmatpush1.msra.mxu0 0.0
  %1057 = vmatprep.mubr.f32.mxu0 0.0
  %1058 = vmatmul.mubr.f32.gmra.mrb[0].mxu0 %v31
  %v1059 = vpop.f32.mrb[0].mxu0
  %v1060 = vadd.f32 0.0, %v1059
  %v1061 = vpop.f32.mrb[0].mxu0
  %1062 = vdwg.mxu0
  %v1063 = vadd.f32 %v992, %v1060
  %v1064 = vxor.u32 %v1063, 2147483648
  %v1065 = vmul.f32 %v1064, 1.442695
  %v1066 = vpow.pop %v1065
  %v1067 = vadd.f32 %v1066, 1.0
  %v1068 = vrcp.pop %v1067
  %v1069 = vmul.f32 1.0, %v1068
  %v1070 = vmul.f32 %v1069, 0.0
  %v1071 = vtanh.pop %v1063
  %1073 = vrot.lane.b32.xlu0 %v1071, 32
  %v1074 = vpop.permute.xlu0 %1073
  %v1076 = vmul.f32 %v1069, %v1074
  %1078 = vrot.lane.b32.xlu0 %v1076, 32
  %v1079 = vpop.permute.xlu0 %1078
  %v1081 = vadd.f32 %v1070, %v1079
  %v1082 = vtanh.pop %v1081
  %1084 = vrot.lane.b32.xlu0 %v1082, 32
  %v1085 = vpop.permute.xlu0 %1084
  %v1087 = vmul.f32 %v1069, %v1085
  %s1088 = scalar_lea.vmem [#allocation2], 8
  %v1089 = vld [vmem:[%s1088] sm:$0xff]
  %1091 = vrot.lane.b32.xlu0 %v1087, 64
  %v1092 = vpop.permute.xlu0 %1091
  %v1093 = vsel %vm29, %v1092, 0
  %1095 = vmatprep.subr.mxu0 0.0
  %1096 = vmatpush1.msra.mxu0 %v872
  %1097 = vmatprep.subr.mxu0 0.0
  %1098 = vmatpush1.msra.mxu0 %v873
  %1099 = vmatprep.subr.mxu0 0.0
  %1100 = vmatpush1.msra.mxu0 %v874
  %1101 = vmatprep.subr.mxu0 0.0
  %1102 = vmatpush1.msra.mxu0 %v875
  %1103 = vmatprep.subr.mxu0 0.0
  %1104 = vmatpush1.msra.mxu0 0.0
  %1105 = vmatprep.subr.mxu0 0.0
  %1106 = vmatpush1.msra.mxu0 0.0
  %1107 = vmatprep.subr.mxu0 0.0
  %1108 = vmatpush1.msra.mxu0 0.0
  %1109 = vmatprep.subr.mxu0 0.0
  %1110 = vmatpush1.msra.mxu0 0.0
  %1111 = vmatprep.subr.mxu0 0.0
  %1112 = vmatpush1.msra.mxu0 0.0
  %1113 = vmatprep.subr.mxu0 0.0
  %1114 = vmatpush1.msra.mxu0 0.0
  %1115 = vmatprep.subr.mxu0 0.0
  %1116 = vmatpush1.msra.mxu0 0.0
  %1117 = vmatprep.subr.mxu0 0.0
  %1118 = vmatpush1.msra.mxu0 0.0
  %1119 = vmatprep.subr.mxu0 0.0
  %1120 = vmatpush1.msra.mxu0 0.0
  %1121 = vmatprep.subr.mxu0 0.0
  %1122 = vmatpush1.msra.mxu0 0.0
  %1123 = vmatprep.subr.mxu0 0.0
  %1124 = vmatpush1.msra.mxu0 0.0
  %1125 = vmatprep.subr.mxu0 0.0
  %1126 = vmatpush1.msra.mxu0 0.0
  %1127 = vmatprep.subr.mxu0 0.0
  %1128 = vmatpush1.msra.mxu0 0.0
  %1129 = vmatprep.subr.mxu0 0.0
  %1130 = vmatpush1.msra.mxu0 0.0
  %1131 = vmatprep.subr.mxu0 0.0
  %1132 = vmatpush1.msra.mxu0 0.0
  %1133 = vmatprep.subr.mxu0 0.0
  %1134 = vmatpush1.msra.mxu0 0.0
  %1135 = vmatprep.subr.mxu0 0.0
  %1136 = vmatpush1.msra.mxu0 0.0
  %1137 = vmatprep.subr.mxu0 0.0
  %1138 = vmatpush1.msra.mxu0 0.0
  %1139 = vmatprep.subr.mxu0 0.0
  %1140 = vmatpush1.msra.mxu0 0.0
  %1141 = vmatprep.subr.mxu0 0.0
  %1142 = vmatpush1.msra.mxu0 0.0
  %1143 = vmatprep.subr.mxu0 0.0
  %1144 = vmatpush1.msra.mxu0 0.0
  %1145 = vmatprep.subr.mxu0 0.0
  %1146 = vmatpush1.msra.mxu0 0.0
  %1147 = vmatprep.subr.mxu0 0.0
  %1148 = vmatpush1.msra.mxu0 0.0
  %1149 = vmatprep.subr.mxu0 0.0
  %1150 = vmatpush1.msra.mxu0 0.0
  %1151 = vmatprep.subr.mxu0 0.0
  %1152 = vmatpush1.msra.mxu0 0.0
  %1153 = vmatprep.subr.mxu0 0.0
  %1154 = vmatpush1.msra.mxu0 0.0
  %1155 = vmatprep.subr.mxu0 0.0
  %1156 = vmatpush1.msra.mxu0 0.0
  %1157 = vmatprep.subr.mxu0 0.0
  %1158 = vmatpush1.msra.mxu0 0.0
  %1159 = vmatprep.mubr.f32.mxu0 0.0
  %1160 = vmatmul.mubr.f32.gmra.mrb[0].mxu0 %v1093
  %v1161 = vpop.f32.mrb[0].mxu0
  %v1162 = vadd.f32 0.0, %v1161
  %v1163 = vpop.f32.mrb[0].mxu0
  %1164 = vdwg.mxu0
  %v1165 = vadd.f32 %v1089, %v1162
  %v1166 = vxor.u32 %v1165, 2147483648
  %v1167 = vmul.f32 %v1166, 1.442695
  %v1168 = vpow.pop %v1167
  %v1169 = vadd.f32 %v1168, 1.0
  %v1170 = vrcp.pop %v1169
  %v1171 = vmul.f32 1.0, %v1170
  %v1172 = vmul.f32 %v1171, %v1081
  %v1173 = vtanh.pop %v1165
  %1175 = vrot.lane.b32.xlu0 %v1173, 32
  %v1176 = vpop.permute.xlu0 %1175
  %v1178 = vmul.f32 %v1171, %v1176
  %1180 = vrot.lane.b32.xlu0 %v1178, 32
  %v1181 = vpop.permute.xlu0 %1180
  %v1183 = vadd.f32 %v1172, %v1181
  %v1184 = vtanh.pop %v1183
  %1186 = vrot.lane.b32.xlu0 %v1184, 32
  %v1187 = vpop.permute.xlu0 %1186
  %v1189 = vmul.f32 %v1171, %v1187
  %s1190 = scalar_lea.vmem [#allocation2], 16
  %v1191 = vld [vmem:[%s1190] sm:$0xff]
  %1193 = vrot.lane.b32.xlu0 %v1189, 64
  %v1194 = vpop.permute.xlu0 %1193
  %v1195 = vsel %vm29, %v1194, 0
  %1197 = vmatprep.subr.mxu0 0.0
  %1198 = vmatpush1.msra.mxu0 %v872
  %1199 = vmatprep.subr.mxu0 0.0
  %1200 = vmatpush1.msra.mxu0 %v873
  %1201 = vmatprep.subr.mxu0 0.0
  %1202 = vmatpush1.msra.mxu0 %v874
  %1203 = vmatprep.subr.mxu0 0.0
  %1204 = vmatpush1.msra.mxu0 %v875
  %1205 = vmatprep.subr.mxu0 0.0
  %1206 = vmatpush1.msra.mxu0 0.0
  %1207 = vmatprep.subr.mxu0 0.0
  %1208 = vmatpush1.msra.mxu0 0.0
  %1209 = vmatprep.subr.mxu0 0.0
  %1210 = vmatpush1.msra.mxu0 0.0
  %1211 = vmatprep.subr.mxu0 0.0
  %1212 = vmatpush1.msra.mxu0 0.0
  %1213 = vmatprep.subr.mxu0 0.0
  %1214 = vmatpush1.msra.mxu0 0.0
  %1215 = vmatprep.subr.mxu0 0.0
  %1216 = vmatpush1.msra.mxu0 0.0
  %1217 = vmatprep.subr.mxu0 0.0
  %1218 = vmatpush1.msra.mxu0 0.0
  %1219 = vmatprep.subr.mxu0 0.0
  %1220 = vmatpush1.msra.mxu0 0.0
  %1221 = vmatprep.subr.mxu0 0.0
  %1222 = vmatpush1.msra.mxu0 0.0
  %1223 = vmatprep.subr.mxu0 0.0
  %1224 = vmatpush1.msra.mxu0 0.0
  %1225 = vmatprep.subr.mxu0 0.0
  %1226 = vmatpush1.msra.mxu0 0.0
  %1227 = vmatprep.subr.mxu0 0.0
  %1228 = vmatpush1.msra.mxu0 0.0
  %1229 = vmatprep.subr.mxu0 0.0
  %1230 = vmatpush1.msra.mxu0 0.0
  %1231 = vmatprep.subr.mxu0 0.0
  %1232 = vmatpush1.msra.mxu0 0.0
  %1233 = vmatprep.subr.mxu0 0.0
  %1234 = vmatpush1.msra.mxu0 0.0
  %1235 = vmatprep.subr.mxu0 0.0
  %1236 = vmatpush1.msra.mxu0 0.0
  %1237 = vmatprep.subr.mxu0 0.0
  %1238 = vmatpush1.msra.mxu0 0.0
  %1239 = vmatprep.subr.mxu0 0.0
  %1240 = vmatpush1.msra.mxu0 0.0
  %1241 = vmatprep.subr.mxu0 0.0
  %1242 = vmatpush1.msra.mxu0 0.0
  %1243 = vmatprep.subr.mxu0 0.0
  %1244 = vmatpush1.msra.mxu0 0.0
  %1245 = vmatprep.subr.mxu0 0.0
  %1246 = vmatpush1.msra.mxu0 0.0
  %1247 = vmatprep.subr.mxu0 0.0
  %1248 = vmatpush1.msra.mxu0 0.0
  %1249 = vmatprep.subr.mxu0 0.0
  %1250 = vmatpush1.msra.mxu0 0.0
  %1251 = vmatprep.subr.mxu0 0.0
  %1252 = vmatpush1.msra.mxu0 0.0
  %1253 = vmatprep.subr.mxu0 0.0
  %1254 = vmatpush1.msra.mxu0 0.0
  %1255 = vmatprep.subr.mxu0 0.0
  %1256 = vmatpush1.msra.mxu0 0.0
  %1257 = vmatprep.subr.mxu0 0.0
  %1258 = vmatpush1.msra.mxu0 0.0
  %1259 = vmatprep.subr.mxu0 0.0
  %1260 = vmatpush1.msra.mxu0 0.0
  %1261 = vmatprep.mubr.f32.mxu0 0.0
  %1262 = vmatmul.mubr.f32.gmra.mrb[0].mxu0 %v1195
  %v1263 = vpop.f32.mrb[0].mxu0
  %v1264 = vadd.f32 0.0, %v1263
  %v1265 = vpop.f32.mrb[0].mxu0
  %1266 = vdwg.mxu0
  %v1267 = vadd.f32 %v1191, %v1264
  %v1268 = vxor.u32 %v1267, 2147483648
  %v1269 = vmul.f32 %v1268, 1.442695
  %v1270 = vpow.pop %v1269
  %v1271 = vadd.f32 %v1270, 1.0
  %v1272 = vrcp.pop %v1271
  %v1273 = vmul.f32 1.0, %v1272
  %v1274 = vmul.f32 %v1273, %v1183
  %v1275 = vtanh.pop %v1267
  %1277 = vrot.lane.b32.xlu0 %v1275, 32
  %v1278 = vpop.permute.xlu0 %1277
  %v1280 = vmul.f32 %v1273, %v1278
  %1282 = vrot.lane.b32.xlu0 %v1280, 32
  %v1283 = vpop.permute.xlu0 %1282
  %v1285 = vadd.f32 %v1274, %v1283
  %v1286 = vtanh.pop %v1285
  %1288 = vrot.lane.b32.xlu0 %v1286, 32
  %v1289 = vpop.permute.xlu0 %1288
  %v1291 = vmul.f32 %v1273, %v1289
  %s1292 = scalar_lea.vmem [#allocation2], 24
  %v1293 = vld [vmem:[%s1292] sm:$0xff]
  %1295 = vrot.lane.b32.xlu0 %v1291, 64
  %v1296 = vpop.permute.xlu0 %1295
  %v1297 = vsel %vm29, %v1296, 0
  %1299 = vmatprep.subr.mxu0 0.0
  %1300 = vmatpush1.msra.mxu0 %v872
  %1301 = vmatprep.subr.mxu0 0.0
  %1302 = vmatpush1.msra.mxu0 %v873
  %1303 = vmatprep.subr.mxu0 0.0
  %1304 = vmatpush1.msra.mxu0 %v874
  %1305 = vmatprep.subr.mxu0 0.0
  %1306 = vmatpush1.msra.mxu0 %v875
  %1307 = vmatprep.subr.mxu0 0.0
  %1308 = vmatpush1.msra.mxu0 0.0
  %1309 = vmatprep.subr.mxu0 0.0
  %1310 = vmatpush1.msra.mxu0 0.0
  %1311 = vmatprep.subr.mxu0 0.0
  %1312 = vmatpush1.msra.mxu0 0.0
  %1313 = vmatprep.subr.mxu0 0.0
  %1314 = vmatpush1.msra.mxu0 0.0
  %1315 = vmatprep.subr.mxu0 0.0
  %1316 = vmatpush1.msra.mxu0 0.0
  %1317 = vmatprep.subr.mxu0 0.0
  %1318 = vmatpush1.msra.mxu0 0.0
  %1319 = vmatprep.subr.mxu0 0.0
  %1320 = vmatpush1.msra.mxu0 0.0
  %1321 = vmatprep.subr.mxu0 0.0
  %1322 = vmatpush1.msra.mxu0 0.0
  %1323 = vmatprep.subr.mxu0 0.0
  %1324 = vmatpush1.msra.mxu0 0.0
  %1325 = vmatprep.subr.mxu0 0.0
  %1326 = vmatpush1.msra.mxu0 0.0
  %1327 = vmatprep.subr.mxu0 0.0
  %1328 = vmatpush1.msra.mxu0 0.0
  %1329 = vmatprep.subr.mxu0 0.0
  %1330 = vmatpush1.msra.mxu0 0.0
  %1331 = vmatprep.subr.mxu0 0.0
  %1332 = vmatpush1.msra.mxu0 0.0
  %1333 = vmatprep.subr.mxu0 0.0
  %1334 = vmatpush1.msra.mxu0 0.0
  %1335 = vmatprep.subr.mxu0 0.0
  %1336 = vmatpush1.msra.mxu0 0.0
  %1337 = vmatprep.subr.mxu0 0.0
  %1338 = vmatpush1.msra.mxu0 0.0
  %1339 = vmatprep.subr.mxu0 0.0
  %1340 = vmatpush1.msra.mxu0 0.0
  %1341 = vmatprep.subr.mxu0 0.0
  %1342 = vmatpush1.msra.mxu0 0.0
  %1343 = vmatprep.subr.mxu0 0.0
  %1344 = vmatpush1.msra.mxu0 0.0
  %1345 = vmatprep.subr.mxu0 0.0
  %1346 = vmatpush1.msra.mxu0 0.0
  %1347 = vmatprep.subr.mxu0 0.0
  %1348 = vmatpush1.msra.mxu0 0.0
  %1349 = vmatprep.subr.mxu0 0.0
  %1350 = vmatpush1.msra.mxu0 0.0
  %1351 = vmatprep.subr.mxu0 0.0
  %1352 = vmatpush1.msra.mxu0 0.0
  %1353 = vmatprep.subr.mxu0 0.0
  %1354 = vmatpush1.msra.mxu0 0.0
  %1355 = vmatprep.subr.mxu0 0.0
  %1356 = vmatpush1.msra.mxu0 0.0
  %1357 = vmatprep.subr.mxu0 0.0
  %1358 = vmatpush1.msra.mxu0 0.0
  %1359 = vmatprep.subr.mxu0 0.0
  %1360 = vmatpush1.msra.mxu0 0.0
  %1361 = vmatprep.subr.mxu0 0.0
  %1362 = vmatpush1.msra.mxu0 0.0
  %1363 = vmatprep.mubr.f32.mxu0 0.0
  %1364 = vmatmul.mubr.f32.gmra.mrb[0].mxu0 %v1297
  %v1365 = vpop.f32.mrb[0].mxu0
  %v1366 = vadd.f32 0.0, %v1365
  %v1367 = vpop.f32.mrb[0].mxu0
  %1368 = vdwg.mxu0
  %v1369 = vadd.f32 %v1293, %v1366
  %v1370 = vxor.u32 %v1369, 2147483648
  %v1371 = vmul.f32 %v1370, 1.442695
  %v1372 = vpow.pop %v1371
  %v1373 = vadd.f32 %v1372, 1.0
  %v1374 = vrcp.pop %v1373
  %v1375 = vmul.f32 1.0, %v1374
  %v1376 = vmul.f32 %v1375, %v1285
  %v1377 = vtanh.pop %v1369
  %1379 = vrot.lane.b32.xlu0 %v1377, 32
  %v1380 = vpop.permute.xlu0 %1379
  %v1382 = vmul.f32 %v1375, %v1380
  %1384 = vrot.lane.b32.xlu0 %v1382, 32
  %v1385 = vpop.permute.xlu0 %1384
  %v1387 = vadd.f32 %v1376, %v1385
  %v1388 = vtanh.pop %v1387
  %1390 = vrot.lane.b32.xlu0 %v1388, 32
  %v1391 = vpop.permute.xlu0 %1390
  %v1393 = vmul.f32 %v1375, %v1391
  %s1394 = scalar_lea.vmem [#allocation2], 32
  %v1395 = vld [vmem:[%s1394] sm:$0xff]
  %1397 = vrot.lane.b32.xlu0 %v1393, 64
  %v1398 = vpop.permute.xlu0 %1397
  %v1399 = vsel %vm29, %v1398, 0
  %1401 = vmatprep.subr.mxu0 0.0
  %1402 = vmatpush1.msra.mxu0 %v872
  %1403 = vmatprep.subr.mxu0 0.0
  %1404 = vmatpush1.msra.mxu0 %v873
  %1405 = vmatprep.subr.mxu0 0.0
  %1406 = vmatpush1.msra.mxu0 %v874
  %1407 = vmatprep.subr.mxu0 0.0
  %1408 = vmatpush1.msra.mxu0 %v875
  %1409 = vmatprep.subr.mxu0 0.0
  %1410 = vmatpush1.msra.mxu0 0.0
  %1411 = vmatprep.subr.mxu0 0.0
  %1412 = vmatpush1.msra.mxu0 0.0
  %1413 = vmatprep.subr.mxu0 0.0
  %1414 = vmatpush1.msra.mxu0 0.0
  %1415 = vmatprep.subr.mxu0 0.0
  %1416 = vmatpush1.msra.mxu0 0.0
  %1417 = vmatprep.subr.mxu0 0.0
  %1418 = vmatpush1.msra.mxu0 0.0
  %1419 = vmatprep.subr.mxu0 0.0
  %1420 = vmatpush1.msra.mxu0 0.0
  %1421 = vmatprep.subr.mxu0 0.0
  %1422 = vmatpush1.msra.mxu0 0.0
  %1423 = vmatprep.subr.mxu0 0.0
  %1424 = vmatpush1.msra.mxu0 0.0
  %1425 = vmatprep.subr.mxu0 0.0
  %1426 = vmatpush1.msra.mxu0 0.0
  %1427 = vmatprep.subr.mxu0 0.0
  %1428 = vmatpush1.msra.mxu0 0.0
  %1429 = vmatprep.subr.mxu0 0.0
  %1430 = vmatpush1.msra.mxu0 0.0
  %1431 = vmatprep.subr.mxu0 0.0
  %1432 = vmatpush1.msra.mxu0 0.0
  %1433 = vmatprep.subr.mxu0 0.0
  %1434 = vmatpush1.msra.mxu0 0.0
  %1435 = vmatprep.subr.mxu0 0.0
  %1436 = vmatpush1.msra.mxu0 0.0
  %1437 = vmatprep.subr.mxu0 0.0
  %1438 = vmatpush1.msra.mxu0 0.0
  %1439 = vmatprep.subr.mxu0 0.0
  %1440 = vmatpush1.msra.mxu0 0.0
  %1441 = vmatprep.subr.mxu0 0.0
  %1442 = vmatpush1.msra.mxu0 0.0
  %1443 = vmatprep.subr.mxu0 0.0
  %1444 = vmatpush1.msra.mxu0 0.0
  %1445 = vmatprep.subr.mxu0 0.0
  %1446 = vmatpush1.msra.mxu0 0.0
  %1447 = vmatprep.subr.mxu0 0.0
  %1448 = vmatpush1.msra.mxu0 0.0
  %1449 = vmatprep.subr.mxu0 0.0
  %1450 = vmatpush1.msra.mxu0 0.0
  %1451 = vmatprep.subr.mxu0 0.0
  %1452 = vmatpush1.msra.mxu0 0.0
  %1453 = vmatprep.subr.mxu0 0.0
  %1454 = vmatpush1.msra.mxu0 0.0
  %1455 = vmatprep.subr.mxu0 0.0
  %1456 = vmatpush1.msra.mxu0 0.0
  %1457 = vmatprep.subr.mxu0 0.0
  %1458 = vmatpush1.msra.mxu0 0.0
  %1459 = vmatprep.subr.mxu0 0.0
  %1460 = vmatpush1.msra.mxu0 0.0
  %1461 = vmatprep.subr.mxu0 0.0
  %1462 = vmatpush1.msra.mxu0 0.0
  %1463 = vmatprep.subr.mxu0 0.0
  %1464 = vmatpush1.msra.mxu0 0.0
  %1465 = vmatprep.mubr.f32.mxu0 0.0
  %1466 = vmatmul.mubr.f32.gmra.mrb[0].mxu0 %v1399
  %v1467 = vpop.f32.mrb[0].mxu0
  %v1468 = vadd.f32 0.0, %v1467
  %v1469 = vpop.f32.mrb[0].mxu0
  %1470 = vdwg.mxu0
  %v1471 = vadd.f32 %v1395, %v1468
  %v1472 = vxor.u32 %v1471, 2147483648
  %v1473 = vmul.f32 %v1472, 1.442695
  %v1474 = vpow.pop %v1473
  %v1475 = vadd.f32 %v1474, 1.0
  %v1476 = vrcp.pop %v1475
  %v1477 = vmul.f32 1.0, %v1476
  %v1478 = vmul.f32 %v1477, %v1387
  %v1479 = vtanh.pop %v1471
  %1481 = vrot.lane.b32.xlu0 %v1479, 32
  %v1482 = vpop.permute.xlu0 %1481
  %v1484 = vmul.f32 %v1477, %v1482
  %1486 = vrot.lane.b32.xlu0 %v1484, 32
  %v1487 = vpop.permute.xlu0 %1486
  %v1489 = vadd.f32 %v1478, %v1487
  %v1490 = vtanh.pop %v1489
  %1492 = vrot.lane.b32.xlu0 %v1490, 32
  %v1493 = vpop.permute.xlu0 %1492
  %v1495 = vmul.f32 %v1477, %v1493
  %s1496 = scalar_lea.vmem [#allocation2], 40
  %v1497 = vld [vmem:[%s1496] sm:$0xff]
  %1499 = vrot.lane.b32.xlu0 %v1495, 64
  %v1500 = vpop.permute.xlu0 %1499
  %v1501 = vsel %vm29, %v1500, 0
  %1503 = vmatprep.subr.mxu0 0.0
  %1504 = vmatpush1.msra.mxu0 %v872
  %1505 = vmatprep.subr.mxu0 0.0
  %1506 = vmatpush1.msra.mxu0 %v873
  %1507 = vmatprep.subr.mxu0 0.0
  %1508 = vmatpush1.msra.mxu0 %v874
  %1509 = vmatprep.subr.mxu0 0.0
  %1510 = vmatpush1.msra.mxu0 %v875
  %1511 = vmatprep.subr.mxu0 0.0
  %1512 = vmatpush1.msra.mxu0 0.0
  %1513 = vmatprep.subr.mxu0 0.0
  %1514 = vmatpush1.msra.mxu0 0.0
  %1515 = vmatprep.subr.mxu0 0.0
  %1516 = vmatpush1.msra.mxu0 0.0
  %1517 = vmatprep.subr.mxu0 0.0
  %1518 = vmatpush1.msra.mxu0 0.0
  %1519 = vmatprep.subr.mxu0 0.0
  %1520 = vmatpush1.msra.mxu0 0.0
  %1521 = vmatprep.subr.mxu0 0.0
  %1522 = vmatpush1.msra.mxu0 0.0
  %1523 = vmatprep.subr.mxu0 0.0
  %1524 = vmatpush1.msra.mxu0 0.0
  %1525 = vmatprep.subr.mxu0 0.0
  %1526 = vmatpush1.msra.mxu0 0.0
  %1527 = vmatprep.subr.mxu0 0.0
  %1528 = vmatpush1.msra.mxu0 0.0
  %1529 = vmatprep.subr.mxu0 0.0
  %1530 = vmatpush1.msra.mxu0 0.0
  %1531 = vmatprep.subr.mxu0 0.0
  %1532 = vmatpush1.msra.mxu0 0.0
  %1533 = vmatprep.subr.mxu0 0.0
  %1534 = vmatpush1.msra.mxu0 0.0
  %1535 = vmatprep.subr.mxu0 0.0
  %1536 = vmatpush1.msra.mxu0 0.0
  %1537 = vmatprep.subr.mxu0 0.0
  %1538 = vmatpush1.msra.mxu0 0.0
  %1539 = vmatprep.subr.mxu0 0.0
  %1540 = vmatpush1.msra.mxu0 0.0
  %1541 = vmatprep.subr.mxu0 0.0
  %1542 = vmatpush1.msra.mxu0 0.0
  %1543 = vmatprep.subr.mxu0 0.0
  %1544 = vmatpush1.msra.mxu0 0.0
  %1545 = vmatprep.subr.mxu0 0.0
  %1546 = vmatpush1.msra.mxu0 0.0
  %1547 = vmatprep.subr.mxu0 0.0
  %1548 = vmatpush1.msra.mxu0 0.0
  %1549 = vmatprep.subr.mxu0 0.0
  %1550 = vmatpush1.msra.mxu0 0.0
  %1551 = vmatprep.subr.mxu0 0.0
  %1552 = vmatpush1.msra.mxu0 0.0
  %1553 = vmatprep.subr.mxu0 0.0
  %1554 = vmatpush1.msra.mxu0 0.0
  %1555 = vmatprep.subr.mxu0 0.0
  %1556 = vmatpush1.msra.mxu0 0.0
  %1557 = vmatprep.subr.mxu0 0.0
  %1558 = vmatpush1.msra.mxu0 0.0
  %1559 = vmatprep.subr.mxu0 0.0
  %1560 = vmatpush1.msra.mxu0 0.0
  %1561 = vmatprep.subr.mxu0 0.0
  %1562 = vmatpush1.msra.mxu0 0.0
  %1563 = vmatprep.subr.mxu0 0.0
  %1564 = vmatpush1.msra.mxu0 0.0
  %1565 = vmatprep.subr.mxu0 0.0
  %1566 = vmatpush1.msra.mxu0 0.0
  %1567 = vmatprep.mubr.f32.mxu0 0.0
  %1568 = vmatmul.mubr.f32.gmra.mrb[0].mxu0 %v1501
  %v1569 = vpop.f32.mrb[0].mxu0
  %v1570 = vadd.f32 0.0, %v1569
  %v1571 = vpop.f32.mrb[0].mxu0
  %1572 = vdwg.mxu0
  %v1573 = vadd.f32 %v1497, %v1570
  %v1574 = vxor.u32 %v1573, 2147483648
  %v1575 = vmul.f32 %v1574, 1.442695
  %v1576 = vpow.pop %v1575
  %v1577 = vadd.f32 %v1576, 1.0
  %v1578 = vrcp.pop %v1577
  %v1579 = vmul.f32 1.0, %v1578
  %v1580 = vmul.f32 %v1579, %v1489
  %v1581 = vtanh.pop %v1573
  %1583 = vrot.lane.b32.xlu0 %v1581, 32
  %v1584 = vpop.permute.xlu0 %1583
  %v1586 = vmul.f32 %v1579, %v1584
  %1588 = vrot.lane.b32.xlu0 %v1586, 32
  %v1589 = vpop.permute.xlu0 %1588
  %v1591 = vadd.f32 %v1580, %v1589
  %v1592 = vtanh.pop %v1591
  %1594 = vrot.lane.b32.xlu0 %v1592, 32
  %v1595 = vpop.permute.xlu0 %1594
  %v1597 = vmul.f32 %v1579, %v1595
  %s1598 = scalar_lea.vmem [#allocation2], 48
  %v1599 = vld [vmem:[%s1598] sm:$0xff]
  %1601 = vrot.lane.b32.xlu0 %v1597, 64
  %v1602 = vpop.permute.xlu0 %1601
  %v1603 = vsel %vm29, %v1602, 0
  %1605 = vmatprep.subr.mxu0 0.0
  %1606 = vmatpush1.msra.mxu0 %v872
  %1607 = vmatprep.subr.mxu0 0.0
  %1608 = vmatpush1.msra.mxu0 %v873
  %1609 = vmatprep.subr.mxu0 0.0
  %1610 = vmatpush1.msra.mxu0 %v874
  %1611 = vmatprep.subr.mxu0 0.0
  %1612 = vmatpush1.msra.mxu0 %v875
  %1613 = vmatprep.subr.mxu0 0.0
  %1614 = vmatpush1.msra.mxu0 0.0
  %1615 = vmatprep.subr.mxu0 0.0
  %1616 = vmatpush1.msra.mxu0 0.0
  %1617 = vmatprep.subr.mxu0 0.0
  %1618 = vmatpush1.msra.mxu0 0.0
  %1619 = vmatprep.subr.mxu0 0.0
  %1620 = vmatpush1.msra.mxu0 0.0
  %1621 = vmatprep.subr.mxu0 0.0
  %1622 = vmatpush1.msra.mxu0 0.0
  %1623 = vmatprep.subr.mxu0 0.0
  %1624 = vmatpush1.msra.mxu0 0.0
  %1625 = vmatprep.subr.mxu0 0.0
  %1626 = vmatpush1.msra.mxu0 0.0
  %1627 = vmatprep.subr.mxu0 0.0
  %1628 = vmatpush1.msra.mxu0 0.0
  %1629 = vmatprep.subr.mxu0 0.0
  %1630 = vmatpush1.msra.mxu0 0.0
  %1631 = vmatprep.subr.mxu0 0.0
  %1632 = vmatpush1.msra.mxu0 0.0
  %1633 = vmatprep.subr.mxu0 0.0
  %1634 = vmatpush1.msra.mxu0 0.0
  %1635 = vmatprep.subr.mxu0 0.0
  %1636 = vmatpush1.msra.mxu0 0.0
  %1637 = vmatprep.subr.mxu0 0.0
  %1638 = vmatpush1.msra.mxu0 0.0
  %1639 = vmatprep.subr.mxu0 0.0
  %1640 = vmatpush1.msra.mxu0 0.0
  %1641 = vmatprep.subr.mxu0 0.0
  %1642 = vmatpush1.msra.mxu0 0.0
  %1643 = vmatprep.subr.mxu0 0.0
  %1644 = vmatpush1.msra.mxu0 0.0
  %1645 = vmatprep.subr.mxu0 0.0
  %1646 = vmatpush1.msra.mxu0 0.0
  %1647 = vmatprep.subr.mxu0 0.0
  %1648 = vmatpush1.msra.mxu0 0.0
  %1649 = vmatprep.subr.mxu0 0.0
  %1650 = vmatpush1.msra.mxu0 0.0
  %1651 = vmatprep.subr.mxu0 0.0
  %1652 = vmatpush1.msra.mxu0 0.0
  %1653 = vmatprep.subr.mxu0 0.0
  %1654 = vmatpush1.msra.mxu0 0.0
  %1655 = vmatprep.subr.mxu0 0.0
  %1656 = vmatpush1.msra.mxu0 0.0
  %1657 = vmatprep.subr.mxu0 0.0
  %1658 = vmatpush1.msra.mxu0 0.0
  %1659 = vmatprep.subr.mxu0 0.0
  %1660 = vmatpush1.msra.mxu0 0.0
  %1661 = vmatprep.subr.mxu0 0.0
  %1662 = vmatpush1.msra.mxu0 0.0
  %1663 = vmatprep.subr.mxu0 0.0
  %1664 = vmatpush1.msra.mxu0 0.0
  %1665 = vmatprep.subr.mxu0 0.0
  %1666 = vmatpush1.msra.mxu0 0.0
  %1667 = vmatprep.subr.mxu0 0.0
  %1668 = vmatpush1.msra.mxu0 0.0
  %1669 = vmatprep.mubr.f32.mxu0 0.0
  %1670 = vmatmul.mubr.f32.gmra.mrb[0].mxu0 %v1603
  %v1671 = vpop.f32.mrb[0].mxu0
  %v1672 = vadd.f32 0.0, %v1671
  %v1673 = vpop.f32.mrb[0].mxu0
  %1674 = vdwg.mxu0
  %v1675 = vadd.f32 %v1599, %v1672
  %v1676 = vxor.u32 %v1675, 2147483648
  %v1677 = vmul.f32 %v1676, 1.442695
  %v1678 = vpow.pop %v1677
  %v1679 = vadd.f32 %v1678, 1.0
  %v1680 = vrcp.pop %v1679
  %v1681 = vmul.f32 1.0, %v1680
  %v1682 = vmul.f32 %v1681, %v1591
  %v1683 = vtanh.pop %v1675
  %1685 = vrot.lane.b32.xlu0 %v1683, 32
  %v1686 = vpop.permute.xlu0 %1685
  %v1688 = vmul.f32 %v1681, %v1686
  %1690 = vrot.lane.b32.xlu0 %v1688, 32
  %v1691 = vpop.permute.xlu0 %1690
  %v1693 = vadd.f32 %v1682, %v1691
  %v1694 = vtanh.pop %v1693
  %1696 = vrot.lane.b32.xlu0 %v1694, 32
  %v1697 = vpop.permute.xlu0 %1696
  %v1699 = vmul.f32 %v1681, %v1697
  %s1700 = scalar_lea.vmem [#allocation2], 56
  %v1701 = vld [vmem:[%s1700] sm:$0xff]
  %1703 = vrot.lane.b32.xlu0 %v1699, 64
  %v1704 = vpop.permute.xlu0 %1703
  %v1705 = vsel %vm29, %v1704, 0
  %1707 = vmatprep.subr.mxu0 0.0
  %1708 = vmatpush1.msra.mxu0 %v872
  %1709 = vmatprep.subr.mxu0 0.0
  %1710 = vmatpush1.msra.mxu0 %v873
  %1711 = vmatprep.subr.mxu0 0.0
  %1712 = vmatpush1.msra.mxu0 %v874
  %1713 = vmatprep.subr.mxu0 0.0
  %1714 = vmatpush1.msra.mxu0 %v875
  %1715 = vmatprep.subr.mxu0 0.0
  %1716 = vmatpush1.msra.mxu0 0.0
  %1717 = vmatprep.subr.mxu0 0.0
  %1718 = vmatpush1.msra.mxu0 0.0
  %1719 = vmatprep.subr.mxu0 0.0
  %1720 = vmatpush1.msra.mxu0 0.0
  %1721 = vmatprep.subr.mxu0 0.0
  %1722 = vmatpush1.msra.mxu0 0.0
  %1723 = vmatprep.subr.mxu0 0.0
  %1724 = vmatpush1.msra.mxu0 0.0
  %1725 = vmatprep.subr.mxu0 0.0
  %1726 = vmatpush1.msra.mxu0 0.0
  %1727 = vmatprep.subr.mxu0 0.0
  %1728 = vmatpush1.msra.mxu0 0.0
  %1729 = vmatprep.subr.mxu0 0.0
  %1730 = vmatpush1.msra.mxu0 0.0
  %1731 = vmatprep.subr.mxu0 0.0
  %1732 = vmatpush1.msra.mxu0 0.0
  %1733 = vmatprep.subr.mxu0 0.0
  %1734 = vmatpush1.msra.mxu0 0.0
  %1735 = vmatprep.subr.mxu0 0.0
  %1736 = vmatpush1.msra.mxu0 0.0
  %1737 = vmatprep.subr.mxu0 0.0
  %1738 = vmatpush1.msra.mxu0 0.0
  %1739 = vmatprep.subr.mxu0 0.0
  %1740 = vmatpush1.msra.mxu0 0.0
  %1741 = vmatprep.subr.mxu0 0.0
  %1742 = vmatpush1.msra.mxu0 0.0
  %1743 = vmatprep.subr.mxu0 0.0
  %1744 = vmatpush1.msra.mxu0 0.0
  %1745 = vmatprep.subr.mxu0 0.0
  %1746 = vmatpush1.msra.mxu0 0.0
  %1747 = vmatprep.subr.mxu0 0.0
  %1748 = vmatpush1.msra.mxu0 0.0
  %1749 = vmatprep.subr.mxu0 0.0
  %1750 = vmatpush1.msra.mxu0 0.0
  %1751 = vmatprep.subr.mxu0 0.0
  %1752 = vmatpush1.msra.mxu0 0.0
  %1753 = vmatprep.subr.mxu0 0.0
  %1754 = vmatpush1.msra.mxu0 0.0
  %1755 = vmatprep.subr.mxu0 0.0
  %1756 = vmatpush1.msra.mxu0 0.0
  %1757 = vmatprep.subr.mxu0 0.0
  %1758 = vmatpush1.msra.mxu0 0.0
  %1759 = vmatprep.subr.mxu0 0.0
  %1760 = vmatpush1.msra.mxu0 0.0
  %1761 = vmatprep.subr.mxu0 0.0
  %1762 = vmatpush1.msra.mxu0 0.0
  %1763 = vmatprep.subr.mxu0 0.0
  %1764 = vmatpush1.msra.mxu0 0.0
  %1765 = vmatprep.subr.mxu0 0.0
  %1766 = vmatpush1.msra.mxu0 0.0
  %1767 = vmatprep.subr.mxu0 0.0
  %1768 = vmatpush1.msra.mxu0 0.0
  %1769 = vmatprep.subr.mxu0 0.0
  %1770 = vmatpush1.msra.mxu0 0.0
  %1771 = vmatprep.mubr.f32.mxu0 0.0
  %1772 = vmatmul.mubr.f32.gmra.mrb[0].mxu0 %v1705
  %v1773 = vpop.f32.mrb[0].mxu0
  %v1774 = vadd.f32 0.0, %v1773
  %v1775 = vpop.f32.mrb[0].mxu0
  %1776 = vdwg.mxu0
  %v1777 = vadd.f32 %v1701, %v1774
  %v1778 = vxor.u32 %v1777, 2147483648
  %v1779 = vmul.f32 %v1778, 1.442695
  %v1780 = vpow.pop %v1779
  %v1781 = vadd.f32 %v1780, 1.0
  %v1782 = vrcp.pop %v1781
  %v1783 = vmul.f32 1.0, %v1782
  %v1784 = vmul.f32 %v1783, %v1693
  %v1785 = vtanh.pop %v1777
  %1787 = vrot.lane.b32.xlu0 %v1785, 32
  %v1788 = vpop.permute.xlu0 %1787
  %v1790 = vmul.f32 %v1783, %v1788
  %1792 = vrot.lane.b32.xlu0 %v1790, 32
  %v1793 = vpop.permute.xlu0 %1792
  %v1795 = vadd.f32 %v1784, %v1793
  %v1796 = vtanh.pop %v1795
  %1798 = vrot.lane.b32.xlu0 %v1796, 32
  %v1799 = vpop.permute.xlu0 %1798
  %v1801 = vmul.f32 %v1783, %v1799
  %v1802 = vpack.c.bf16 %v1801, %v1801
  %v1803 = vld [vmem:[%s5] sm:$0xf]
  %v1804 = vld [vmem:[%s5 + $0x4] sm:$0xf]
  %v1805 = vld [vmem:[%s5 + $0x8] sm:$0xf]
  %v1806 = vld [vmem:[%s5 + $0xc] sm:$0xf]
  %1808 = vrot.lane.b32.xlu0 %v1802, 64
  %v1809 = vpop.permute.xlu0 %1808
  %v1814 = vunpack.c.l.b16 %v1803
  %v1815 = vunpack.c.l.b16 %v1804
  %v1816 = vunpack.c.l.b16 %v1805
  %v1817 = vunpack.c.l.b16 %v1806
  %v1818 = vpack.c.b16 %v1815, %v1814
  %v1819 = vpack.c.b16 %v1817, %v1816
  %v1823 = vsel %vm29, %v1809, 0
  %1825 = vmatprep.subr.bf16.mxu0 0
  %1826 = vmatpush1.bf16.msra.mxu0 %v1818
  %1827 = vmatprep.subr.bf16.mxu0 0
  %1828 = vmatpush1.bf16.msra.mxu0 %v1819
  %1829 = vmatprep.subr.bf16.mxu0 0
  %1830 = vmatpush1.bf16.msra.mxu0 0
  %1831 = vmatprep.subr.bf16.mxu0 0
  %1832 = vmatpush1.bf16.msra.mxu0 0
  %1833 = vmatprep.subr.bf16.mxu0 0
  %1834 = vmatpush1.bf16.msra.mxu0 0
  %1835 = vmatprep.subr.bf16.mxu0 0
  %1836 = vmatpush1.bf16.msra.mxu0 0
  %1837 = vmatprep.subr.bf16.mxu0 0
  %1838 = vmatpush1.bf16.msra.mxu0 0
  %1839 = vmatprep.subr.bf16.mxu0 0
  %1840 = vmatpush1.bf16.msra.mxu0 0
  %1841 = vmatprep.subr.bf16.mxu0 0
  %1842 = vmatpush1.bf16.msra.mxu0 0
  %1843 = vmatprep.subr.bf16.mxu0 0
  %1844 = vmatpush1.bf16.msra.mxu0 0
  %1845 = vmatprep.subr.bf16.mxu0 0
  %1846 = vmatpush1.bf16.msra.mxu0 0
  %1847 = vmatprep.subr.bf16.mxu0 0
  %1848 = vmatpush1.bf16.msra.mxu0 0
  %1849 = vmatprep.subr.bf16.mxu0 0
  %1850 = vmatpush1.bf16.msra.mxu0 0
  %1851 = vmatprep.subr.bf16.mxu0 0
  %1852 = vmatpush1.bf16.msra.mxu0 0
  %1853 = vmatprep.subr.bf16.mxu0 0
  %1854 = vmatpush1.bf16.msra.mxu0 0
  %1855 = vmatprep.subr.bf16.mxu0 0
  %1856 = vmatpush1.bf16.msra.mxu0 0
  %1857 = vmatprep.mubr.bf16.mxu0 0
  %1858 = vmatmul.mubr.bf16.gmra.mrb[0].mxu0 %v1823
  %v1859 = vpop.f32.mrb[0].mxu0
  %v1860 = vadd.f32 0.0, %v1859
  %v1861 = vpop.f32.mrb[0].mxu0
  %v1862 = vpop.f32.mrb[0].mxu0
  %v1863 = vpop.f32.mrb[0].mxu0
  %1864 = vdwg.mxu0
  %v1865 = vmul.f32 %v1860, %v1860
  %1866 = vadd.xlane.f32.xlu0 %v1865
  %v1867 = vpop.xlane.xlu0 %1866
  %v1868 = vrsqrt.pop %v1867
  %v1869 = vmul.f32 %v1867, %v1868
  %vm1870 = vcmp.eq.f32.partialorder %v1867, inf
  %v1871 = vsel %vm1870, %v1867, %v1869
  %vm1872 = vcmp.eq.f32.partialorder %v1867, 0.0
  %v1873 = vand.u32 %v1867, 2147483648
  %v1874 = vsel %vm1872, %v1873, %v1871
  %v1875 = vmax.f32 %v1874, 1e-12
  %v1876 = vrcp.pop %v1875
  %v1877 = vmul.f32 %v1860, %v1876
  %1878 = vst [vmem:[%s6] sm:$0xff] %v1877
  // Predicated region
  $region26: #{eeg_featnet_forward.1} parent=0 // pred_check
    _
  $region27: #{eeg_featnet_forward.1} parent=0 // pred_check_branch
    %1880 = sbr.rel (0) target = $region29
  $region28: #{eeg_featnet_forward.1} parent=0 // pred_region
    _
  $region29: #{eeg_featnet_forward.1} parent=0 // pred_fallthru
    _
  // Predicated region
  $region30: #{eeg_featnet_forward.1} parent=0 // pred_check
    _
  $region31: #{eeg_featnet_forward.1} parent=0 // pred_check_branch
    %1882 = sbr.rel (0) target = $region33
  $region32: #{eeg_featnet_forward.1} parent=0 // pred_region
    _
  $region33: #{eeg_featnet_forward.1} parent=0 // pred_fallthru
    _

</llo_original>
